<compile_context>
chip_gen: v7x
topology: tpu7x:2x2x1
jax: 0.10.0
libtpu: 0.0.40
codegen_flags: <defaults>
</compile_context>

<pallas_src>
import functools

import jax
import jax.numpy as jnp
from jax.experimental import pallas as pl
from jax.experimental.pallas import tpu as pltpu


def _conv_block_kernel(xm_ref, xh_ref, w_ref, shift_ref, o_ref, *,
                       negative_slope, w_cols, th):
    """One grid step = one batch image, TH output rows (flattened as TH*W)."""
    rows = th * w_cols                        # output positions (incl. pad col w=W-1)

    main = xm_ref[0]                          # (TH*W, Cin) f32: rows [r*TH, r*TH+TH)
    halo = xh_ref[0]                          # (W, Cin)    f32: row   r*TH+TH
    # TH+1 image rows (+ one extra halo copy so the pad column's taps never
    # index past the end).  Concat boundaries are sublane-tile aligned (W % 8 == 0).
    slab = jnp.concatenate([main, halo, halo], axis=0).astype(jnp.bfloat16)

    t00 = slab[0:rows]                        # x[h    , w    ]
    t01 = slab[1:rows + 1]                    # x[h    , w + 1]
    t10 = slab[w_cols:w_cols + rows]          # x[h + 1, w    ]
    t11 = slab[w_cols + 1:w_cols + 1 + rows]  # x[h + 1, w + 1]

    # 4 taps -> 4 big MXU matmuls, f32 accumulation.  (BN scale already folded
    # into the weights at init time.)
    acc = jnp.dot(t00, w_ref[0], preferred_element_type=jnp.float32)
    acc = acc + jnp.dot(t01, w_ref[1], preferred_element_type=jnp.float32)
    acc = acc + jnp.dot(t10, w_ref[2], preferred_element_type=jnp.float32)
    acc = acc + jnp.dot(t11, w_ref[3], preferred_element_type=jnp.float32)

    y = acc + shift_ref[...]                  # folded conv-bias + BN shift
    y = jnp.where(y >= 0.0, y, negative_slope * y)   # LeakyReLU
    o_ref[0] = y.astype(o_ref.dtype)


def fold_conv_bn_params(conv_weight, conv_bias, bn_gamma, bn_beta,
                        bn_running_mean, bn_running_var, *, eps=1e-5,
                        weight_dtype=jnp.bfloat16):
    """One-time (init-time) parameter prep — NOT in the per-call hot path.

    conv_weight: (Cout, Cin, 2, 2) PyTorch layout.
    Returns: w_packed (4, Cin, Cout) with the BN scale folded in (bf16),
             eff_shift (Cout,) f32.
    """
    c_out, c_in, kh, kw = conv_weight.shape
    assert (kh, kw) == (2, 2), "ConvBlock uses a fixed 2x2 kernel"
    inv_std = 1.0 / jnp.sqrt(bn_running_var.astype(jnp.float32) + eps)
    eff_scale = bn_gamma.astype(jnp.float32) * inv_std
    eff_shift = ((conv_bias.astype(jnp.float32)
                  - bn_running_mean.astype(jnp.float32)) * eff_scale
                 + bn_beta.astype(jnp.float32))
    # (Cout, Cin, 2, 2) -> (kh*kw, Cin, Cout); fold BN scale in f32, then cast.
    w_packed = jnp.transpose(conv_weight.astype(jnp.float32),
                             (2, 3, 1, 0)).reshape(kh * kw, c_in, c_out)
    w_packed = w_packed * eff_scale[None, None, :]
    return w_packed.astype(weight_dtype), eff_shift


def _pick_row_block(n, ho, w, c_in, c_out, *, x_bytes=4, out_bytes=2,
                    budget_bytes=12 * 1024 * 1024):
    """Largest row block TH (divisor of Ho preferred) under a VMEM budget."""
    def rup(v, m):
        return -(-v // m) * m

    def fits(th):
        rows = th * w
        in_blk = rup(rows, 8) * rup(c_in, 128) * x_bytes
        halo_blk = rup(w, 8) * rup(c_in, 128) * x_bytes
        out_blk = rup(rows, 8) * rup(c_out, 128) * out_bytes
        wts = 4 * rup(c_in, 8) * rup(c_out, 128) * 2
        return 2 * (in_blk + halo_blk + out_blk) + 2 * wts <= budget_bytes

    # If the batch axis cannot feed both v7x TensorCores, keep >=2 row blocks.
    cap = ho if n >= 2 else max(1, -(-ho // 2))
    divs = [t for t in range(1, cap + 1) if ho % t == 0 and fits(t)]
    if divs:
        return max(divs)
    any_fit = [t for t in range(1, cap + 1) if fits(t)]
    return max(any_fit) if any_fit else 1


def conv_block_forward(x_nhwc, w_packed, eff_shift, *, negative_slope=0.01,
                       out_dtype=jnp.bfloat16):
    """x_nhwc: (N, H, W, Cin) f32. Returns (N, H-1, W-1, Cout) NHWC in out_dtype."""
    n, h, w, c_in = x_nhwc.shape
    c_out = w_packed.shape[-1]
    ho, wo = h - 1, w - 1
    assert w % 8 == 0, "fast path assumes W is a multiple of 8 (sublane tile)"

    th = _pick_row_block(n, ho, w, c_in, c_out)
    n_rb = pl.cdiv(ho, th)
    rows = th * w

    # Free reshape: merge (H, W) keeping the channel (lane) dim minor.
    x_flat = x_nhwc.reshape(n, h * w, c_in)
    shift2 = eff_shift.reshape(1, c_out).astype(jnp.float32)

    kernel = functools.partial(_conv_block_kernel,
                               negative_slope=negative_slope, w_cols=w, th=th)

    out_bytes = jnp.dtype(out_dtype).itemsize
    cost = pl.CostEstimate(
        flops=2 * n * ho * wo * 4 * c_in * c_out,
        transcendentals=0,
        bytes_accessed=(x_flat.size * 4                       # main read
                        + n * n_rb * w * c_in * 4             # halo rows
                        + w_packed.size * 2 + shift2.size * 4
                        + n * ho * w * c_out * out_bytes))

    out_flat = pl.pallas_call(
        kernel,
        out_shape=jax.ShapeDtypeStruct((n, ho * w, c_out), out_dtype),
        grid=(n, n_rb),
        in_specs=[
            # Main block: TH image rows, each row read exactly once from HBM.
            pl.BlockSpec((1, rows, c_in), lambda b, r: (b, r, 0)),
            # Halo block: the single image row below the main block.
            pl.BlockSpec((1, w, c_in),
                         lambda b, r: (b, jnp.minimum(r * th + th, h - 1), 0)),
            # Weights + folded shift: constant index_map -> VMEM-resident.
            pl.BlockSpec((4, c_in, c_out), lambda b, r: (0, 0, 0)),
            pl.BlockSpec((1, c_out), lambda b, r: (0, 0)),
        ],
        out_specs=pl.BlockSpec((1, rows, c_out), lambda b, r: (b, r, 0)),
        compiler_params=pltpu.CompilerParams(
            dimension_semantics=("parallel", "parallel"),
            vmem_limit_bytes=32 * 1024 * 1024),
        cost_estimate=cost,
    )(x_flat, x_flat, w_packed, shift2)

    # Drop the padded w = W-1 column; the reshape itself is layout-free.
    return out_flat.reshape(n, ho, w, c_out)[:, :, :wo, :]


def _reference(x_nchw, w_packed, eff_shift, *, negative_slope=0.01):
    """Pure-JAX reference using the same folded/packed bf16 weights and
    bf16-rounded inputs as the kernel, with f32 math."""
    x = jnp.transpose(x_nchw, (0, 2, 3, 1)).astype(jnp.bfloat16).astype(jnp.float32)
    wts = w_packed.astype(jnp.float32)                 # (4, Cin, Cout), BN-scaled
    n, h, w, _ = x.shape
    ho, wo = h - 1, w - 1
    c_out = wts.shape[-1]
    out = jnp.zeros((n, ho, wo, c_out), jnp.float32)
    for kh in range(2):
        for kw in range(2):
            patch = x[:, kh:kh + ho, kw:kw + wo, :]
            out = out + jnp.einsum('nhwc,co->nhwo', patch, wts[kh * 2 + kw])
    out = out + eff_shift
    out = jnp.where(out >= 0.0, out, negative_slope * out)
    return jnp.transpose(out, (0, 3, 1, 2))            # NCHW


if __name__ == "__main__":
    key = jax.random.PRNGKey(0)
    k_w, k_b, k_g, k_be, k_m, k_v, k_x = jax.random.split(key, 7)

    N, C_IN, C_OUT, H, W = 2, 4, 8, 16, 16

    # PyTorch-style Conv2d init (uniform +-1/sqrt(fan_in)), random BN params.
    fan_in = C_IN * 2 * 2
    bound = 1.0 / (fan_in ** 0.5)
    conv_weight = jax.random.uniform(k_w, (C_OUT, C_IN, 2, 2), jnp.float32, -bound, bound)
    conv_bias = jax.random.uniform(k_b, (C_OUT,), jnp.float32, -bound, bound)
    bn_gamma = jax.random.uniform(k_g, (C_OUT,), jnp.float32, 0.5, 1.5)
    bn_beta = jax.random.uniform(k_be, (C_OUT,), jnp.float32, -0.5, 0.5)
    bn_mean = 0.1 * jax.random.normal(k_m, (C_OUT,), jnp.float32)
    bn_var = jax.random.uniform(k_v, (C_OUT,), jnp.float32, 0.5, 1.5)
    x_nchw = jax.random.normal(k_x, (N, C_IN, H, W), jnp.float32)

    # One-time parameter prep (init-time, not per forward call).
    w_packed, eff_shift = fold_conv_bn_params(
        conv_weight, conv_bias, bn_gamma, bn_beta, bn_mean, bn_var)

    # One-time layout change to channels-last (real pipelines stay NHWC).
    x_nhwc = jnp.transpose(x_nchw, (0, 2, 3, 1))

    out_nhwc = conv_block_forward(x_nhwc, w_packed, eff_shift)
    out_nhwc = jax.block_until_ready(out_nhwc)
    out_nchw = jnp.transpose(out_nhwc, (0, 3, 1, 2)).astype(jnp.float32)

    ref = _reference(x_nchw, w_packed, eff_shift)
    assert out_nchw.shape == (N, C_OUT, H - 1, W - 1), out_nchw.shape
    max_err = float(jnp.max(jnp.abs(out_nchw - ref)))
    assert jnp.allclose(out_nchw, ref, atol=2e-2, rtol=2e-2), max_err

    print("KERNEL_OK")
</pallas_src>

<mosaic_0001>
module attributes {stable_mosaic.version = 11 : i64} {
  func.func @_conv_block_kernel(%arg0: i32, %arg1: i32, %arg2: memref<1x240x4xf32, #tpu.memory_space<vmem>>, %arg3: memref<1x16x4xf32, #tpu.memory_space<vmem>>, %arg4: memref<4x4x8xbf16, #tpu.memory_space<vmem>>, %arg5: memref<1x8xf32, #tpu.memory_space<vmem>>, %arg6: memref<1x240x8xbf16, #tpu.memory_space<vmem>>) attributes {dimension_semantics = [#tpu.dimension_semantics<parallel>, #tpu.dimension_semantics<parallel>], iteration_bounds = array<i64: 2, 1>, scalar_prefetch = 0 : i64, scratch_operands = 0 : i64, tpu.core_type = #tpu.core_type<tc>, window_params = [{transform_indices = @transform_0, window_bounds = array<i64: 1, 240, 4>}, {transform_indices = @transform_1, window_bounds = array<i64: 1, 16, 4>}, {pipeline_mode = #tpu.pipeline_mode<synchronous>, transform_indices = @transform_2, window_bounds = array<i64: 4, 4, 8>}, {pipeline_mode = #tpu.pipeline_mode<synchronous>, transform_indices = @transform_3, window_bounds = array<i64: 1, 8>}, {transform_indices = @transform_4, window_bounds = array<i64: 1, 240, 8>}]} {
    %c0 = arith.constant 0 : index
    %c0_0 = arith.constant 0 : index
    %c0_1 = arith.constant 0 : index
    %0 = vector.load %arg2[%c0, %c0_0, %c0_1] : memref<1x240x4xf32, #tpu.memory_space<vmem>>, vector<1x240x4xf32>
    %1 = vector.shape_cast %0 : vector<1x240x4xf32> to vector<240x4xf32>
    %c0_2 = arith.constant 0 : index
    %c0_3 = arith.constant 0 : index
    %c0_4 = arith.constant 0 : index
    %2 = vector.load %arg3[%c0_2, %c0_3, %c0_4] : memref<1x16x4xf32, #tpu.memory_space<vmem>>, vector<1x16x4xf32>
    %3 = vector.shape_cast %2 : vector<1x16x4xf32> to vector<16x4xf32>
    %4 = tpu.concatenate %1, %3, %3 in 0 : vector<240x4xf32>, vector<16x4xf32>, vector<16x4xf32> -> vector<272x4xf32>
    %5 = arith.truncf %4 : vector<272x4xf32> to vector<272x4xbf16>
    %6 = vector.extract_strided_slice %5 {offsets = [0, 0], sizes = [240, 4], strides = [1, 1]} : vector<272x4xbf16> to vector<240x4xbf16>
    %7 = vector.extract_strided_slice %5 {offsets = [1, 0], sizes = [240, 4], strides = [1, 1]} : vector<272x4xbf16> to vector<240x4xbf16>
    %8 = vector.extract_strided_slice %5 {offsets = [16, 0], sizes = [240, 4], strides = [1, 1]} : vector<272x4xbf16> to vector<240x4xbf16>
    %9 = vector.extract_strided_slice %5 {offsets = [17, 0], sizes = [240, 4], strides = [1, 1]} : vector<272x4xbf16> to vector<240x4xbf16>
    %c0_5 = arith.constant 0 : index
    %c0_6 = arith.constant 0 : index
    %c0_7 = arith.constant 0 : index
    %10 = vector.load %arg4[%c0_5, %c0_6, %c0_7] : memref<4x4x8xbf16, #tpu.memory_space<vmem>>, vector<1x4x8xbf16>
    %11 = vector.shape_cast %10 : vector<1x4x8xbf16> to vector<4x8xbf16>
    %cst = arith.constant dense<0.000000e+00> : vector<240x8xf32>
    %12 = tpu.matmul %6, %11, %cst {dimension_numbers = #tpu.dot_dimension_numbers<[1], [0], [0], [1], [0, 0, 1, 1], [], []>} : vector<240x4xbf16>, vector<4x8xbf16>, vector<240x8xf32> -> vector<240x8xf32>
    %c1 = arith.constant 1 : index
    %c0_8 = arith.constant 0 : index
    %c0_9 = arith.constant 0 : index
    %13 = vector.load %arg4[%c1, %c0_8, %c0_9] : memref<4x4x8xbf16, #tpu.memory_space<vmem>>, vector<1x4x8xbf16>
    %14 = vector.shape_cast %13 : vector<1x4x8xbf16> to vector<4x8xbf16>
    %cst_10 = arith.constant dense<0.000000e+00> : vector<240x8xf32>
    %15 = tpu.matmul %7, %14, %cst_10 {dimension_numbers = #tpu.dot_dimension_numbers<[1], [0], [0], [1], [0, 0, 1, 1], [], []>} : vector<240x4xbf16>, vector<4x8xbf16>, vector<240x8xf32> -> vector<240x8xf32>
    %16 = arith.addf %12, %15 : vector<240x8xf32>
    %c2 = arith.constant 2 : index
    %c0_11 = arith.constant 0 : index
    %c0_12 = arith.constant 0 : index
    %17 = vector.load %arg4[%c2, %c0_11, %c0_12] : memref<4x4x8xbf16, #tpu.memory_space<vmem>>, vector<1x4x8xbf16>
    %18 = vector.shape_cast %17 : vector<1x4x8xbf16> to vector<4x8xbf16>
    %cst_13 = arith.constant dense<0.000000e+00> : vector<240x8xf32>
    %19 = tpu.matmul %8, %18, %cst_13 {dimension_numbers = #tpu.dot_dimension_numbers<[1], [0], [0], [1], [0, 0, 1, 1], [], []>} : vector<240x4xbf16>, vector<4x8xbf16>, vector<240x8xf32> -> vector<240x8xf32>
    %20 = arith.addf %16, %19 : vector<240x8xf32>
    %c3 = arith.constant 3 : index
    %c0_14 = arith.constant 0 : index
    %c0_15 = arith.constant 0 : index
    %21 = vector.load %arg4[%c3, %c0_14, %c0_15] : memref<4x4x8xbf16, #tpu.memory_space<vmem>>, vector<1x4x8xbf16>
    %22 = vector.shape_cast %21 : vector<1x4x8xbf16> to vector<4x8xbf16>
    %cst_16 = arith.constant dense<0.000000e+00> : vector<240x8xf32>
    %23 = tpu.matmul %9, %22, %cst_16 {dimension_numbers = #tpu.dot_dimension_numbers<[1], [0], [0], [1], [0, 0, 1, 1], [], []>} : vector<240x4xbf16>, vector<4x8xbf16>, vector<240x8xf32> -> vector<240x8xf32>
    %24 = arith.addf %20, %23 : vector<240x8xf32>
    %c0_17 = arith.constant 0 : index
    %c0_18 = arith.constant 0 : index
    %25 = vector.load %arg5[%c0_17, %c0_18] : memref<1x8xf32, #tpu.memory_space<vmem>>, vector<1x8xf32>
    %26 = vector.broadcast %25 : vector<1x8xf32> to vector<240x8xf32>
    %27 = arith.addf %24, %26 : vector<240x8xf32>
    %cst_19 = arith.constant 0.000000e+00 : f32
    %28 = vector.broadcast %cst_19 : f32 to vector<240x8xf32>
    %29 = arith.cmpf oge, %27, %28 : vector<240x8xf32>
    %cst_20 = arith.constant 0.00999999977 : f32
    %30 = vector.broadcast %cst_20 : f32 to vector<240x8xf32>
    %31 = arith.mulf %30, %27 : vector<240x8xf32>
    %32 = arith.select %29, %27, %31 : vector<240x8xi1>, vector<240x8xf32>
    %33 = arith.truncf %32 : vector<240x8xf32> to vector<240x8xbf16>
    %c0_21 = arith.constant 0 : index
    %c0_22 = arith.constant 0 : index
    %c0_23 = arith.constant 0 : index
    %34 = vector.load %arg6[%c0_21, %c0_22, %c0_23] : memref<1x240x8xbf16, #tpu.memory_space<vmem>>, vector<1x240x8xbf16>
    %35 = vector.shape_cast %34 : vector<1x240x8xbf16> to vector<240x8xbf16>
    %36 = vector.shape_cast %33 : vector<240x8xbf16> to vector<1x240x8xbf16>
    tpu.vector_store %arg6[%c0_21, %c0_22, %c0_23], %36 {strides = array<i32>} : memref<1x240x8xbf16, #tpu.memory_space<vmem>>, vector<1x240x8xbf16>,
    return
  }
  func.func @transform_0(%arg0: i32, %arg1: i32) -> (i32, i32, i32) {
    %c0_i32 = arith.constant 0 : i32
    %c0_i32_0 = arith.constant 0 : i32
    return %arg0, %arg1, %c0_i32 : i32, i32, i32
  }
  func.func @transform_1(%arg0: i32, %arg1: i32) -> (i32, i32, i32) {
    %c15_i32 = arith.constant 15 : i32
    %0 = arith.muli %arg1, %c15_i32 : i32
    %c15_i32_0 = arith.constant 15 : i32
    %1 = arith.addi %0, %c15_i32_0 : i32
    %c15_i32_1 = arith.constant 15 : i32
    %2 = arith.minsi %1, %c15_i32_1 : i32
    %c0_i32 = arith.constant 0 : i32
    %c0_i32_2 = arith.constant 0 : i32
    return %arg0, %2, %c0_i32 : i32, i32, i32
  }
  func.func @transform_2(%arg0: i32, %arg1: i32) -> (i32, i32, i32) {
    %c0_i32 = arith.constant 0 : i32
    %c0_i32_0 = arith.constant 0 : i32
    %c0_i32_1 = arith.constant 0 : i32
    %c0_i32_2 = arith.constant 0 : i32
    return %c0_i32, %c0_i32_0, %c0_i32_1 : i32, i32, i32
  }
  func.func @transform_3(%arg0: i32, %arg1: i32) -> (i32, i32) {
    %c0_i32 = arith.constant 0 : i32
    %c0_i32_0 = arith.constant 0 : i32
    %c0_i32_1 = arith.constant 0 : i32
    return %c0_i32, %c0_i32_0 : i32, i32
  }
  func.func @transform_4(%arg0: i32, %arg1: i32) -> (i32, i32, i32) {
    %c0_i32 = arith.constant 0 : i32
    %c0_i32_0 = arith.constant 0 : i32
    return %arg0, %arg1, %c0_i32 : i32, i32, i32
  }
}

</mosaic_0001>

<llo_original>
// kernel: tpu_custom_call.1
$region0: #{tpu_custom_call.1}
  #allocation0 [shape = 'u32[]', space=smem, size = 0x4, offset = 0x4, fixed_abs, tag = 'smem constant byte address 0x4 - core index']
  #allocation1 [shape = 'u32[144,128]{1,0:T(1,128)}', space=vmem, size = 0x12000, scoped, tag = 'internal scratch']
  %s0 = inlined_call_operand.vmem [shape: f32[2,256,4], index: 0, kind: input, shape index: {}]
  %s1 = inlined_call_operand.vmem [shape: f32[2,256,4], index: 1, kind: input, shape index: {}]
  %s2 = inlined_call_operand.vmem [shape: bf16[4,4,8], index: 2, kind: input, shape index: {}]
  %s3 = inlined_call_operand.vmem [shape: f32[1,8], index: 3, kind: input, shape index: {}]
  %s4 = inlined_call_operand.vmem [shape: bf16[2,240,8], index: 4, kind: output, shape index: {}]
  %s5 = sld [smem:[#allocation0]]
  $region49: #{tpu_custom_call.1} parent=0
    _
  %s7 = ssub.s32 1, %s5
  %s8 = scalar_select 0, %s7, %s5
  loop: start=0, step=1, limit=4
  $region2: #{tpu_custom_call.1} parent=0 // loop_pre_header
    _
  $region3: #{tpu_custom_call.1} parent=0 // loop_header
    %s10 = sphi 0, %s14
    %p11 = scmp.ge.s32.totalorder %s10, 4
    %s17 = sphi 0, %s29
    %s18 = sphi 0, %s25
    %s19 = sphi 0, %s17
    %s20 = sphi 0, %s18
    %s21 = sphi 0, %s19
    %s22 = sphi 0, %s20
    %s34 = sphi 0, %s36
    %s37 = sphi 0, %s34
    %s38 = sphi 0, %s37
    %s54 = sphi 0, %s38
    %s70 = sphi 0, %s72
    %s73 = sphi 0, %s70
    %s74 = sphi 0, %s73
    %s90 = sphi 0, %s74
    %s94 = sphi 0, %s94
    %s96 = sphi 0, %s94
    %s97 = sphi 0, %s96
    %s111 = sphi 0, %s97
    %s115 = sphi 0, %s115
    %s117 = sphi 0, %s115
    %s118 = sphi 0, %s117
    %s132 = sphi 0, %s118
    %s140 = sphi 0, %s142
    %s143 = sphi 0, %s140
    %s144 = sphi 0, %s143
    %s160 = sphi 0, %s144
  $region4: #{tpu_custom_call.1} parent=0 // loop_header_branch
    %13 = sbr.rel (%p11) target = $region8
  $region5: #{tpu_custom_call.1} parent=0 // loop_body
    %s15 = ssub.s32 %s10, 1
    %s16 = ssub.s32 %s10, 2
    %s23 = sadd.s32 1, %s18
    %p24 = scmp.ge.s32.totalorder %s23, 1
    %s25 = scalar_select %p24, 0, %s23
    %s26 = sadd.s32 1, %s17
    %s27 = scalar_select %p24, %s26, %s17
    %p28 = scmp.ge.s32.totalorder %s27, 2
    %s29 = scalar_select %p28, 0, %s27
    %s30 = ssub.s32 %s17, %s29
    %s31 = ssub.s32 %s18, %s25
    %s32 = sor.u32 %s30, %s31
    %p33 = scmp.eq.s32.totalorder %s32, 0
    %s35 = sadd.s32 %s34, 1
    %s36 = scalar_select %p33, %s34, %s35
    %p39 = pneg %p33
    %p40 = scmp.eq.s32.totalorder %s10, 1
    %p41 = por %p39, %p40
    %p42 = scmp.ne.s32.totalorder %s34, %s37
    %p43 = scmp.eq.s32.totalorder %s10, 0
    %p44 = por %p42, %p43
    %p45 = scmp.ne.s32.totalorder %s34, %s37
    %p46 = scmp.eq.s32.totalorder %s15, 1
    %p47 = por %p45, %p46
    %p48 = scmp.ne.s32.totalorder %s37, %s38
    %p49 = scmp.eq.s32.totalorder %s15, 0
    %p50 = por %p48, %p49
    %p51 = scmp.ne.s32.totalorder %s37, %s38
    %p52 = scmp.eq.s32.totalorder %s16, 1
    %p53 = por %p51, %p52
    %p55 = scmp.ne.s32.totalorder %s38, %s54
    %p56 = scmp.eq.s32.totalorder %s16, 0
    %p57 = por %p55, %p56
    %s58 = smul.u32 %s18, 15
    %s59 = sadd.s32 %s58, 15
    %p60 = scmp.lt.s32.totalorder %s59, 15
    %s61 = scalar_select %p60, %s59, 15
    %s62 = smul.u32 %s25, 15
    %s63 = sadd.s32 %s62, 15
    %p64 = scmp.lt.s32.totalorder %s63, 15
    %s65 = scalar_select %p64, %s63, 15
    %s66 = ssub.s32 %s17, %s29
    %s67 = ssub.s32 %s61, %s65
    %s68 = sor.u32 %s66, %s67
    %p69 = scmp.eq.s32.totalorder %s68, 0
    %s71 = sadd.s32 %s70, 1
    %s72 = scalar_select %p69, %s70, %s71
    %p75 = pneg %p69
    %p76 = scmp.eq.s32.totalorder %s10, 1
    %p77 = por %p75, %p76
    %p78 = scmp.ne.s32.totalorder %s70, %s73
    %p79 = scmp.eq.s32.totalorder %s10, 0
    %p80 = por %p78, %p79
    %p81 = scmp.ne.s32.totalorder %s70, %s73
    %p82 = scmp.eq.s32.totalorder %s15, 1
    %p83 = por %p81, %p82
    %p84 = scmp.ne.s32.totalorder %s73, %s74
    %p85 = scmp.eq.s32.totalorder %s15, 0
    %p86 = por %p84, %p85
    %p87 = scmp.ne.s32.totalorder %s73, %s74
    %p88 = scmp.eq.s32.totalorder %s16, 1
    %p89 = por %p87, %p88
    %p91 = scmp.ne.s32.totalorder %s74, %s90
    %p92 = scmp.eq.s32.totalorder %s16, 0
    %p93 = por %p91, %p92
    %s95 = sadd.s32 %s94, 1
    %p98 = scmp.eq.s32.totalorder %s10, 1
    %p99 = scmp.ne.s32.totalorder %s94, %s96
    %p100 = scmp.eq.s32.totalorder %s10, 0
    %p101 = por %p99, %p100
    %p102 = scmp.ne.s32.totalorder %s94, %s96
    %p103 = scmp.eq.s32.totalorder %s15, 1
    %p104 = por %p102, %p103
    %p105 = scmp.ne.s32.totalorder %s96, %s97
    %p106 = scmp.eq.s32.totalorder %s15, 0
    %p107 = por %p105, %p106
    %p108 = scmp.ne.s32.totalorder %s96, %s97
    %p109 = scmp.eq.s32.totalorder %s16, 1
    %p110 = por %p108, %p109
    %p112 = scmp.ne.s32.totalorder %s97, %s111
    %p113 = scmp.eq.s32.totalorder %s16, 0
    %p114 = por %p112, %p113
    %s116 = sadd.s32 %s115, 1
    %p119 = scmp.eq.s32.totalorder %s10, 1
    %p120 = scmp.ne.s32.totalorder %s115, %s117
    %p121 = scmp.eq.s32.totalorder %s10, 0
    %p122 = por %p120, %p121
    %p123 = scmp.ne.s32.totalorder %s115, %s117
    %p124 = scmp.eq.s32.totalorder %s15, 1
    %p125 = por %p123, %p124
    %p126 = scmp.ne.s32.totalorder %s117, %s118
    %p127 = scmp.eq.s32.totalorder %s15, 0
    %p128 = por %p126, %p127
    %p129 = scmp.ne.s32.totalorder %s117, %s118
    %p130 = scmp.eq.s32.totalorder %s16, 1
    %p131 = por %p129, %p130
    %p133 = scmp.ne.s32.totalorder %s118, %s132
    %p134 = scmp.eq.s32.totalorder %s16, 0
    %p135 = por %p133, %p134
    %s136 = ssub.s32 %s17, %s29
    %s137 = ssub.s32 %s18, %s25
    %s138 = sor.u32 %s136, %s137
    %p139 = scmp.eq.s32.totalorder %s138, 0
    %s141 = sadd.s32 %s140, 1
    %s142 = scalar_select %p139, %s140, %s141
    %p145 = pneg %p139
    %p146 = scmp.eq.s32.totalorder %s10, 1
    %p147 = por %p145, %p146
    %p148 = scmp.ne.s32.totalorder %s140, %s143
    %p149 = scmp.eq.s32.totalorder %s10, 0
    %p150 = por %p148, %p149
    %p151 = scmp.ne.s32.totalorder %s140, %s143
    %p152 = scmp.eq.s32.totalorder %s15, 1
    %p153 = por %p151, %p152
    %p154 = scmp.ne.s32.totalorder %s143, %s144
    %p155 = scmp.eq.s32.totalorder %s15, 0
    %p156 = por %p154, %p155
    %p157 = scmp.ne.s32.totalorder %s143, %s144
    %p158 = scmp.eq.s32.totalorder %s16, 1
    %p159 = por %p157, %p158
    %p161 = scmp.ne.s32.totalorder %s144, %s160
    %p162 = scmp.eq.s32.totalorder %s16, 0
    %p163 = por %p161, %p162
    %p164 = scmp.le.s32.totalorder 1, %s10
    %p165 = scmp.lt.s32.totalorder %s10, 3
    %p166 = pnand %p164, %p165
    %p167 = pneg %p166
    // Predicated region
    $region9: #{tpu_custom_call.1} parent=5 // pred_check
      _
    $region10: #{tpu_custom_call.1} parent=5 // pred_check_branch
      %169 = sbr.rel (%p166) target = $region12
    $region11: #{tpu_custom_call.1} parent=5 // pred_region
      %s170 = ssub.s32 %s10, 1
      // Predicated region
      $region13: #{tpu_custom_call.1} parent=11 // pred_check
        %p171 = pneg %p107
      $region14: #{tpu_custom_call.1} parent=11 // pred_check_branch
        %173 = sbr.rel (%p171) target = $region16
      $region15: #{tpu_custom_call.1} parent=11 // pred_region
        _
      $region16: #{tpu_custom_call.1} parent=11 // pred_fallthru
        _
      // Predicated region
      $region17: #{tpu_custom_call.1} parent=11 // pred_check
        %p174 = pneg %p128
      $region18: #{tpu_custom_call.1} parent=11 // pred_check_branch
        %176 = sbr.rel (%p174) target = $region20
      $region19: #{tpu_custom_call.1} parent=11 // pred_region
        _
      $region20: #{tpu_custom_call.1} parent=11 // pred_fallthru
        _
    $region12: #{tpu_custom_call.1} parent=5 // pred_fallthru
      _
    %p177 = scmp.lt.s32.totalorder %s10, 2
    // Predicated region
    $region21: #{tpu_custom_call.1} parent=5 // pred_check
      %p178 = pneg %p177
    $region22: #{tpu_custom_call.1} parent=5 // pred_check_branch
      %180 = sbr.rel (%p178) target = $region24
    $region23: #{tpu_custom_call.1} parent=5 // pred_region
      // Predicated region
      $region25: #{tpu_custom_call.1} parent=23 // pred_check
        %p181 = pneg %p44
      $region26: #{tpu_custom_call.1} parent=23 // pred_check_branch
        %183 = sbr.rel (%p181) target = $region28
      $region27: #{tpu_custom_call.1} parent=23 // pred_region
        %s184 = smul.u32 30, %s18
        %s185 = ssub.s32 32, %s184
        %p186 = scmp.lt.s32.totalorder %s185, 30
        %s187 = scalar_select %p186, %s185, 30
        %s188 = smul.u32 128, %s187
        %p189 = scmp.lt.s32.totalorder %s17, 1
        %s190 = scalar_select %p189, %s17, 1
        %p191 = scmp.lt.s32.totalorder %s184, 31
        %s192 = scalar_select %p191, %s184, 31
        %s193 = smul.addr %s190, 32
        %s194 = sadd.s32 %s192, %s193
        %s195 = smul.addr %s194, 8
        %s196 = scalar_lea.vmem %s0, %s195
        %s197 = smul.u32 30, %s18
        %s198 = ssub.s32 32, %s197
        %p199 = scmp.lt.s32.totalorder %s198, 30
        %s200 = scalar_select %p199, %s198, 30
        %s201 = smul.u32 128, %s200
      $region28: #{tpu_custom_call.1} parent=23 // pred_fallthru
        _
      // Predicated region
      $region29: #{tpu_custom_call.1} parent=23 // pred_check
        %p202 = pneg %p80
      $region30: #{tpu_custom_call.1} parent=23 // pred_check_branch
        %204 = sbr.rel (%p202) target = $region32
      $region31: #{tpu_custom_call.1} parent=23 // pred_region
        %s205 = smul.u32 %s18, 15
        %s206 = sadd.s32 %s205, 15
        %p207 = scmp.lt.s32.totalorder %s206, 15
        %s208 = scalar_select %p207, %s206, 15
        %s209 = smul.u32 2, %s208
        %p210 = scmp.lt.s32.totalorder %s17, 1
        %s211 = scalar_select %p210, %s17, 1
        %p212 = scmp.lt.s32.totalorder %s209, 31
        %s213 = scalar_select %p212, %s209, 31
        %s214 = smul.addr %s211, 32
        %s215 = sadd.s32 %s213, %s214
        %s216 = smul.addr %s215, 8
        %s217 = scalar_lea.vmem %s1, %s216
        %s218 = smul.u32 %s18, 15
        %s219 = sadd.s32 %s218, 15
        %p220 = scmp.lt.s32.totalorder %s219, 15
        %s221 = scalar_select %p220, %s219, 15
        %s222 = smul.u32 2, %s221
      $region32: #{tpu_custom_call.1} parent=23 // pred_fallthru
        _
    $region24: #{tpu_custom_call.1} parent=5 // pred_fallthru
      _
    %p223 = scmp.le.s32.totalorder 1, %s10
    %p224 = scmp.lt.s32.totalorder %s10, 3
    %p225 = pnand %p223, %p224
    %p226 = pneg %p225
    // Predicated region
    $region33: #{tpu_custom_call.1} parent=5 // pred_check
      _
    $region34: #{tpu_custom_call.1} parent=5 // pred_check_branch
      %228 = sbr.rel (%p225) target = $region36
    $region35: #{tpu_custom_call.1} parent=5 // pred_region
      %s229 = ssub.s32 %s10, 1
      %s230 = smul.u32 30, %s20
      %s231 = ssub.s32 32, %s230
      %p232 = scmp.lt.s32.totalorder %s231, 30
      %s233 = scalar_select %p232, %s231, 30
      %s234 = smul.u32 128, %s233
      %p235 = scmp.lt.s32.totalorder %s19, 1
      %s236 = scalar_select %p235, %s19, 1
      %p237 = scmp.lt.s32.totalorder %s230, 31
      %s238 = scalar_select %p237, %s230, 31
      %s239 = smul.addr %s236, 32
      %s240 = sadd.s32 %s238, %s239
      %s241 = smul.addr %s240, 8
      %s242 = scalar_lea.vmem %s0, %s241
      %p243 = pneg %p50
      %p244 = pneg %p47
      %s245 = smul.u32 %s20, 15
      %s246 = sadd.s32 %s245, 15
      %p247 = scmp.lt.s32.totalorder %s246, 15
      %s248 = scalar_select %p247, %s246, 15
      %s249 = smul.u32 2, %s248
      %p250 = scmp.lt.s32.totalorder %s19, 1
      %s251 = scalar_select %p250, %s19, 1
      %p252 = scmp.lt.s32.totalorder %s249, 31
      %s253 = scalar_select %p252, %s249, 31
      %s254 = smul.addr %s251, 32
      %s255 = sadd.s32 %s253, %s254
      %s256 = smul.addr %s255, 8
      %s257 = scalar_lea.vmem %s1, %s256
      %p258 = pneg %p86
      %p259 = pneg %p83
      %p260 = pneg %p107
      %p261 = pneg %p104
      %p262 = pneg %p128
      %p263 = pneg %p125
      %p264 = pneg %p156
      %p265 = pneg %p153
      %s266 = smul.u32 30, %s20
      %p267 = scmp.lt.s32.totalorder %s19, 1
      %s268 = scalar_select %p267, %s19, 1
      %p269 = scmp.lt.s32.totalorder %s266, 29
      %s270 = scalar_select %p269, %s266, 29
      %s271 = smul.addr %s268, 30
      %s272 = sadd.s32 %s270, %s271
      %s273 = smul.addr %s272, 4
      %s274 = scalar_lea.vmem %s4, %s273
      %s275 = smul.u32 30, %s20
      %s276 = ssub.s32 32, %s275
      %p277 = scmp.lt.s32.totalorder %s276, 30
      %s278 = scalar_select %p277, %s276, 30
      %s279 = smul.u32 128, %s278
      %p280 = scmp.lt.s32.totalorder %s19, 1
      %s281 = scalar_select %p280, %s19, 1
      %p282 = scmp.lt.s32.totalorder %s275, 31
      %s283 = scalar_select %p282, %s275, 31
      %s284 = smul.addr %s281, 32
      %s285 = sadd.s32 %s283, %s284
      %s286 = smul.addr %s285, 8
      %s287 = scalar_lea.vmem %s0, %s286
      %s288 = smul.u32 30, %s20
      %s289 = ssub.s32 32, %s288
      %p290 = scmp.lt.s32.totalorder %s289, 30
      %s291 = scalar_select %p290, %s289, 30
      %s292 = smul.u32 128, %s291
      %s293 = smul.u32 %s20, 15
      %s294 = sadd.s32 %s293, 15
      %p295 = scmp.lt.s32.totalorder %s294, 15
      %s296 = scalar_select %p295, %s294, 15
      %s297 = smul.u32 2, %s296
      %p298 = scmp.lt.s32.totalorder %s19, 1
      %s299 = scalar_select %p298, %s19, 1
      %p300 = scmp.lt.s32.totalorder %s297, 31
      %s301 = scalar_select %p300, %s297, 31
      %s302 = smul.addr %s299, 32
      %s303 = sadd.s32 %s301, %s302
      %s304 = smul.addr %s303, 8
      %s305 = scalar_lea.vmem %s1, %s304
      %s306 = smul.u32 %s20, 15
      %s307 = sadd.s32 %s306, 15
      %p308 = scmp.lt.s32.totalorder %s307, 15
      %s309 = scalar_select %p308, %s307, 15
      %s310 = smul.u32 2, %s309
      %s311 = smul.u32 30, %s20
      %p312 = scmp.lt.s32.totalorder %s19, 1
      %s313 = scalar_select %p312, %s19, 1
      %p314 = scmp.lt.s32.totalorder %s311, 29
      %s315 = scalar_select %p314, %s311, 29
      %s316 = smul.addr %s313, 30
      %s317 = sadd.s32 %s315, %s316
      %s318 = smul.addr %s317, 4
      %s319 = scalar_lea.vmem %s4, %s318
      %s320 = smul.u32 30, %s20
      %v322 = vld [vmem:[%s287] sm:$0xff]
      %v323 = vld [vmem:[%s287 + $0x8] sm:$0xff]
      %v324 = vld [vmem:[%s287 + $0x10] sm:$0xff]
      %v325 = vld [vmem:[%s287 + $0x18] sm:$0xff]
      %v326 = vld [vmem:[%s287 + $0x20] sm:$0xff]
      %v327 = vld [vmem:[%s287 + $0x28] sm:$0xff]
      %v328 = vld [vmem:[%s287 + $0x30] sm:$0xff]
      %v329 = vld [vmem:[%s287 + $0x38] sm:$0xff]
      %v330 = vld [vmem:[%s287 + $0x40] sm:$0xff]
      %v331 = vld [vmem:[%s287 + $0x48] sm:$0xff]
      %v332 = vld [vmem:[%s287 + $0x50] sm:$0xff]
      %v333 = vld [vmem:[%s287 + $0x58] sm:$0xff]
      %v334 = vld [vmem:[%s287 + $0x60] sm:$0xff]
      %v335 = vld [vmem:[%s287 + $0x68] sm:$0xff]
      %v336 = vld [vmem:[%s287 + $0x70] sm:$0xff]
      %v337 = vld [vmem:[%s287 + $0x78] sm:$0xff]
      %v338 = vld [vmem:[%s287 + $0x80] sm:$0xff]
      %v339 = vld [vmem:[%s287 + $0x88] sm:$0xff]
      %v340 = vld [vmem:[%s287 + $0x90] sm:$0xff]
      %v341 = vld [vmem:[%s287 + $0x98] sm:$0xff]
      %v342 = vld [vmem:[%s287 + $0xa0] sm:$0xff]
      %v343 = vld [vmem:[%s287 + $0xa8] sm:$0xff]
      %v344 = vld [vmem:[%s287 + $0xb0] sm:$0xff]
      %v345 = vld [vmem:[%s287 + $0xb8] sm:$0xff]
      %v346 = vld [vmem:[%s287 + $0xc0] sm:$0xff]
      %v347 = vld [vmem:[%s287 + $0xc8] sm:$0xff]
      %v348 = vld [vmem:[%s287 + $0xd0] sm:$0xff]
      %v349 = vld [vmem:[%s287 + $0xd8] sm:$0xff]
      %v350 = vld [vmem:[%s287 + $0xe0] sm:$0xff]
      %v351 = vld [vmem:[%s287 + $0xe8] sm:$0xff]
      %v352 = vld [vmem:[%s305] sm:$0xff]
      %v353 = vld [vmem:[%s305 + $0x8] sm:$0xff]
      %v354 = vpack.c.bf16 %v323, %v322
      %v355 = vpack.c.bf16 %v325, %v324
      %v356 = vpack.c.bf16 %v327, %v326
      %v357 = vpack.c.bf16 %v329, %v328
      %v358 = vpack.c.bf16 %v331, %v330
      %v359 = vpack.c.bf16 %v333, %v332
      %v360 = vpack.c.bf16 %v335, %v334
      %v361 = vpack.c.bf16 %v337, %v336
      %v362 = vpack.c.bf16 %v339, %v338
      %v363 = vpack.c.bf16 %v341, %v340
      %v364 = vpack.c.bf16 %v343, %v342
      %v365 = vpack.c.bf16 %v345, %v344
      %v366 = vpack.c.bf16 %v347, %v346
      %v367 = vpack.c.bf16 %v349, %v348
      %v368 = vpack.c.bf16 %v351, %v350
      %v369 = vpack.c.bf16 %v353, %v352
      %v370 = vld [vmem:[%s2] sm:$0x3]
      %s371 = scalar_lea.vmem %s2, 2
      %v372 = vld [vmem:[%s371] sm:$0x3]
      %vm373 = vsmask.f32 7424
      %v375 = vshrl.u32 %v354, 16
      %v377 = vshll.u32 %v354, 16
      %v379 = vrot.slane %v377, 1
      %v380 = vor.u32 %v375, %v379
      %v382 = vshll.u32 %v355, 16
      %v384 = vrot.slane %v382, 1
      %v385 = vsel %vm373, %v380, %v384
      %v386 = vshrl.u32 %v355, 16
      %v388 = vor.u32 %v386, %v384
      %v390 = vshll.u32 %v356, 16
      %v392 = vrot.slane %v390, 1
      %v393 = vsel %vm373, %v388, %v392
      %v394 = vshrl.u32 %v356, 16
      %v396 = vor.u32 %v394, %v392
      %v398 = vshll.u32 %v357, 16
      %v400 = vrot.slane %v398, 1
      %v401 = vsel %vm373, %v396, %v400
      %v402 = vshrl.u32 %v357, 16
      %v404 = vor.u32 %v402, %v400
      %v406 = vshll.u32 %v358, 16
      %v408 = vrot.slane %v406, 1
      %v409 = vsel %vm373, %v404, %v408
      %v410 = vshrl.u32 %v358, 16
      %v412 = vor.u32 %v410, %v408
      %v414 = vshll.u32 %v359, 16
      %v416 = vrot.slane %v414, 1
      %v417 = vsel %vm373, %v412, %v416
      %v418 = vshrl.u32 %v359, 16
      %v420 = vor.u32 %v418, %v416
      %v422 = vshll.u32 %v360, 16
      %v424 = vrot.slane %v422, 1
      %v425 = vsel %vm373, %v420, %v424
      %v426 = vshrl.u32 %v360, 16
      %v428 = vor.u32 %v426, %v424
      %v430 = vshll.u32 %v361, 16
      %v432 = vrot.slane %v430, 1
      %v433 = vsel %vm373, %v428, %v432
      %v434 = vshrl.u32 %v361, 16
      %v436 = vor.u32 %v434, %v432
      %v438 = vshll.u32 %v362, 16
      %v440 = vrot.slane %v438, 1
      %v441 = vsel %vm373, %v436, %v440
      %v442 = vshrl.u32 %v362, 16
      %v444 = vor.u32 %v442, %v440
      %v446 = vshll.u32 %v363, 16
      %v448 = vrot.slane %v446, 1
      %v449 = vsel %vm373, %v444, %v448
      %v450 = vshrl.u32 %v363, 16
      %v452 = vor.u32 %v450, %v448
      %v454 = vshll.u32 %v364, 16
      %v456 = vrot.slane %v454, 1
      %v457 = vsel %vm373, %v452, %v456
      %v458 = vshrl.u32 %v364, 16
      %v460 = vor.u32 %v458, %v456
      %v462 = vshll.u32 %v365, 16
      %v464 = vrot.slane %v462, 1
      %v465 = vsel %vm373, %v460, %v464
      %v466 = vshrl.u32 %v365, 16
      %v468 = vor.u32 %v466, %v464
      %v470 = vshll.u32 %v366, 16
      %v472 = vrot.slane %v470, 1
      %v473 = vsel %vm373, %v468, %v472
      %v474 = vshrl.u32 %v366, 16
      %v476 = vor.u32 %v474, %v472
      %v478 = vshll.u32 %v367, 16
      %v480 = vrot.slane %v478, 1
      %v481 = vsel %vm373, %v476, %v480
      %v482 = vshrl.u32 %v367, 16
      %v484 = vor.u32 %v482, %v480
      %v486 = vshll.u32 %v368, 16
      %v488 = vrot.slane %v486, 1
      %v489 = vsel %vm373, %v484, %v488
      %v490 = vshrl.u32 %v368, 16
      %v492 = vor.u32 %v490, %v488
      %v494 = vshll.u32 %v369, 16
      %v496 = vrot.slane %v494, 1
      %v497 = vsel %vm373, %v492, %v496
      %vm498 = vcmask 31744
      %v500 = vsel %vm498, %v385, 0
      %v503 = vsel %vm498, %v393, 0
      %v506 = vsel %vm498, %v401, 0
      %v509 = vsel %vm498, %v409, 0
      %v512 = vsel %vm498, %v417, 0
      %v515 = vsel %vm498, %v425, 0
      %v518 = vsel %vm498, %v433, 0
      %v521 = vsel %vm498, %v441, 0
      %v524 = vsel %vm498, %v449, 0
      %v527 = vsel %vm498, %v457, 0
      %v530 = vsel %vm498, %v465, 0
      %v533 = vsel %vm498, %v473, 0
      %v536 = vsel %vm498, %v481, 0
      %v539 = vsel %vm498, %v489, 0
      %v542 = vsel %vm498, %v497, 0
      %vm544 = vcmask 1041408
      %v546 = vsel %vm544, %v372, 0
      %548 = vmatprep.subr.bf16.mxu0 0
      %549 = vmatpush1.bf16.msra.mxu0 %v546
      %550 = vmatprep.subr.bf16.mxu0 0
      %551 = vmatpush1.bf16.msra.mxu0 0
      %552 = vmatprep.subr.bf16.mxu0 0
      %553 = vmatpush1.bf16.msra.mxu0 0
      %554 = vmatprep.subr.bf16.mxu0 0
      %555 = vmatpush1.bf16.msra.mxu0 0
      %556 = vmatprep.subr.bf16.mxu0 0
      %557 = vmatpush1.bf16.msra.mxu0 0
      %558 = vmatprep.subr.bf16.mxu0 0
      %559 = vmatpush1.bf16.msra.mxu0 0
      %560 = vmatprep.subr.bf16.mxu0 0
      %561 = vmatpush1.bf16.msra.mxu0 0
      %562 = vmatprep.subr.bf16.mxu0 0
      %563 = vmatpush1.bf16.msra.mxu0 0
      %564 = vmatprep.subr.bf16.mxu0 0
      %565 = vmatpush1.bf16.msra.mxu0 0
      %566 = vmatprep.subr.bf16.mxu0 0
      %567 = vmatpush1.bf16.msra.mxu0 0
      %568 = vmatprep.subr.bf16.mxu0 0
      %569 = vmatpush1.bf16.msra.mxu0 0
      %570 = vmatprep.subr.bf16.mxu0 0
      %571 = vmatpush1.bf16.msra.mxu0 0
      %572 = vmatprep.subr.bf16.mxu0 0
      %573 = vmatpush1.bf16.msra.mxu0 0
      %574 = vmatprep.subr.bf16.mxu0 0
      %575 = vmatpush1.bf16.msra.mxu0 0
      %576 = vmatprep.subr.bf16.mxu0 0
      %577 = vmatpush1.bf16.msra.mxu0 0
      %578 = vmatprep.subr.bf16.mxu0 0
      %579 = vmatpush1.bf16.msra.mxu0 0
      %580 = vmatprep.mubr.bf16.mxu0 0
      %581 = vmatmul.mubr.bf16.gmra.mrb[0].mxu0 %v500
      %v582 = vpop.f32.mrb[0].mxu0
      %v583 = vadd.f32 0.0, %v582
      %v584 = vpop.f32.mrb[0].mxu0
      %v585 = vpop.f32.mrb[0].mxu0
      %v586 = vadd.f32 0.0, %v585
      %v587 = vpop.f32.mrb[0].mxu0
      %588 = vmatprep.mubr.bf16.mxu0 0
      %589 = vmatmul.mubr.bf16.gmra.mrb[0].mxu0 %v503
      %v590 = vpop.f32.mrb[0].mxu0
      %v591 = vadd.f32 0.0, %v590
      %v592 = vpop.f32.mrb[0].mxu0
      %v593 = vpop.f32.mrb[0].mxu0
      %v594 = vadd.f32 0.0, %v593
      %v595 = vpop.f32.mrb[0].mxu0
      %596 = vmatprep.mubr.bf16.mxu0 0
      %597 = vmatmul.mubr.bf16.gmra.mrb[0].mxu0 %v506
      %v598 = vpop.f32.mrb[0].mxu0
      %v599 = vadd.f32 0.0, %v598
      %v600 = vpop.f32.mrb[0].mxu0
      %v601 = vpop.f32.mrb[0].mxu0
      %v602 = vadd.f32 0.0, %v601
      %v603 = vpop.f32.mrb[0].mxu0
      %604 = vmatprep.mubr.bf16.mxu0 0
      %605 = vmatmul.mubr.bf16.gmra.mrb[0].mxu0 %v509
      %v606 = vpop.f32.mrb[0].mxu0
      %v607 = vadd.f32 0.0, %v606
      %v608 = vpop.f32.mrb[0].mxu0
      %v609 = vpop.f32.mrb[0].mxu0
      %v610 = vadd.f32 0.0, %v609
      %v611 = vpop.f32.mrb[0].mxu0
      %612 = vmatprep.mubr.bf16.mxu0 0
      %613 = vmatmul.mubr.bf16.gmra.mrb[0].mxu0 %v512
      %v614 = vpop.f32.mrb[0].mxu0
      %v615 = vadd.f32 0.0, %v614
      %v616 = vpop.f32.mrb[0].mxu0
      %v617 = vpop.f32.mrb[0].mxu0
      %v618 = vadd.f32 0.0, %v617
      %v619 = vpop.f32.mrb[0].mxu0
      %620 = vmatprep.mubr.bf16.mxu0 0
      %621 = vmatmul.mubr.bf16.gmra.mrb[0].mxu0 %v515
      %v622 = vpop.f32.mrb[0].mxu0
      %v623 = vadd.f32 0.0, %v622
      %v624 = vpop.f32.mrb[0].mxu0
      %v625 = vpop.f32.mrb[0].mxu0
      %v626 = vadd.f32 0.0, %v625
      %v627 = vpop.f32.mrb[0].mxu0
      %628 = vmatprep.mubr.bf16.mxu0 0
      %629 = vmatmul.mubr.bf16.gmra.mrb[0].mxu0 %v518
      %v630 = vpop.f32.mrb[0].mxu0
      %v631 = vadd.f32 0.0, %v630
      %v632 = vpop.f32.mrb[0].mxu0
      %v633 = vpop.f32.mrb[0].mxu0
      %v634 = vadd.f32 0.0, %v633
      %v635 = vpop.f32.mrb[0].mxu0
      %636 = vmatprep.mubr.bf16.mxu0 0
      %637 = vmatmul.mubr.bf16.gmra.mrb[0].mxu0 %v521
      %v638 = vpop.f32.mrb[0].mxu0
      %v639 = vadd.f32 0.0, %v638
      %v640 = vpop.f32.mrb[0].mxu0
      %v641 = vpop.f32.mrb[0].mxu0
      %v642 = vadd.f32 0.0, %v641
      %v643 = vpop.f32.mrb[0].mxu0
      %644 = vmatprep.mubr.bf16.mxu0 0
      %645 = vmatmul.mubr.bf16.gmra.mrb[0].mxu0 %v524
      %v646 = vpop.f32.mrb[0].mxu0
      %v647 = vadd.f32 0.0, %v646
      %v648 = vpop.f32.mrb[0].mxu0
      %v649 = vpop.f32.mrb[0].mxu0
      %v650 = vadd.f32 0.0, %v649
      %v651 = vpop.f32.mrb[0].mxu0
      %652 = vmatprep.mubr.bf16.mxu0 0
      %653 = vmatmul.mubr.bf16.gmra.mrb[0].mxu0 %v527
      %v654 = vpop.f32.mrb[0].mxu0
      %v655 = vadd.f32 0.0, %v654
      %v656 = vpop.f32.mrb[0].mxu0
      %v657 = vpop.f32.mrb[0].mxu0
      %v658 = vadd.f32 0.0, %v657
      %v659 = vpop.f32.mrb[0].mxu0
      %660 = vmatprep.mubr.bf16.mxu0 0
      %661 = vmatmul.mubr.bf16.gmra.mrb[0].mxu0 %v530
      %v662 = vpop.f32.mrb[0].mxu0
      %v663 = vadd.f32 0.0, %v662
      %v664 = vpop.f32.mrb[0].mxu0
      %v665 = vpop.f32.mrb[0].mxu0
      %v666 = vadd.f32 0.0, %v665
      %v667 = vpop.f32.mrb[0].mxu0
      %668 = vmatprep.mubr.bf16.mxu0 0
      %669 = vmatmul.mubr.bf16.gmra.mrb[0].mxu0 %v533
      %v670 = vpop.f32.mrb[0].mxu0
      %v671 = vadd.f32 0.0, %v670
      %v672 = vpop.f32.mrb[0].mxu0
      %v673 = vpop.f32.mrb[0].mxu0
      %v674 = vadd.f32 0.0, %v673
      %v675 = vpop.f32.mrb[0].mxu0
      %676 = vmatprep.mubr.bf16.mxu0 0
      %677 = vmatmul.mubr.bf16.gmra.mrb[0].mxu0 %v536
      %v678 = vpop.f32.mrb[0].mxu0
      %v679 = vadd.f32 0.0, %v678
      %v680 = vpop.f32.mrb[0].mxu0
      %v681 = vpop.f32.mrb[0].mxu0
      %v682 = vadd.f32 0.0, %v681
      %v683 = vpop.f32.mrb[0].mxu0
      %684 = vmatprep.mubr.bf16.mxu0 0
      %685 = vmatmul.mubr.bf16.gmra.mrb[0].mxu0 %v539
      %v686 = vpop.f32.mrb[0].mxu0
      %v687 = vadd.f32 0.0, %v686
      %v688 = vpop.f32.mrb[0].mxu0
      %v689 = vpop.f32.mrb[0].mxu0
      %v690 = vadd.f32 0.0, %v689
      %v691 = vpop.f32.mrb[0].mxu0
      %692 = vmatprep.mubr.bf16.mxu0 0
      %693 = vmatmul.mubr.bf16.gmra.mrb[0].mxu0 %v542
      %v694 = vpop.f32.mrb[0].mxu0
      %v695 = vadd.f32 0.0, %v694
      %v696 = vpop.f32.mrb[0].mxu0
      %v697 = vpop.f32.mrb[0].mxu0
      %v698 = vadd.f32 0.0, %v697
      %v699 = vpop.f32.mrb[0].mxu0
      %700 = vdwg.mxu0
      %v701 = vsel %vm498, %v354, 0
      %v703 = vsel %vm498, %v355, 0
      %v705 = vsel %vm498, %v356, 0
      %v707 = vsel %vm498, %v357, 0
      %v709 = vsel %vm498, %v358, 0
      %v711 = vsel %vm498, %v359, 0
      %v713 = vsel %vm498, %v360, 0
      %v715 = vsel %vm498, %v361, 0
      %v717 = vsel %vm498, %v362, 0
      %v719 = vsel %vm498, %v363, 0
      %v721 = vsel %vm498, %v364, 0
      %v723 = vsel %vm498, %v365, 0
      %v725 = vsel %vm498, %v366, 0
      %v727 = vsel %vm498, %v367, 0
      %v729 = vsel %vm498, %v368, 0
      %v732 = vsel %vm544, %v370, 0
      %734 = vmatprep.subr.bf16.mxu0 0
      %735 = vmatpush1.bf16.msra.mxu0 %v732
      %736 = vmatprep.subr.bf16.mxu0 0
      %737 = vmatpush1.bf16.msra.mxu0 0
      %738 = vmatprep.subr.bf16.mxu0 0
      %739 = vmatpush1.bf16.msra.mxu0 0
      %740 = vmatprep.subr.bf16.mxu0 0
      %741 = vmatpush1.bf16.msra.mxu0 0
      %742 = vmatprep.subr.bf16.mxu0 0
      %743 = vmatpush1.bf16.msra.mxu0 0
      %744 = vmatprep.subr.bf16.mxu0 0
      %745 = vmatpush1.bf16.msra.mxu0 0
      %746 = vmatprep.subr.bf16.mxu0 0
      %747 = vmatpush1.bf16.msra.mxu0 0
      %748 = vmatprep.subr.bf16.mxu0 0
      %749 = vmatpush1.bf16.msra.mxu0 0
      %750 = vmatprep.subr.bf16.mxu0 0
      %751 = vmatpush1.bf16.msra.mxu0 0
      %752 = vmatprep.subr.bf16.mxu0 0
      %753 = vmatpush1.bf16.msra.mxu0 0
      %754 = vmatprep.subr.bf16.mxu0 0
      %755 = vmatpush1.bf16.msra.mxu0 0
      %756 = vmatprep.subr.bf16.mxu0 0
      %757 = vmatpush1.bf16.msra.mxu0 0
      %758 = vmatprep.subr.bf16.mxu0 0
      %759 = vmatpush1.bf16.msra.mxu0 0
      %760 = vmatprep.subr.bf16.mxu0 0
      %761 = vmatpush1.bf16.msra.mxu0 0
      %762 = vmatprep.subr.bf16.mxu0 0
      %763 = vmatpush1.bf16.msra.mxu0 0
      %764 = vmatprep.subr.bf16.mxu0 0
      %765 = vmatpush1.bf16.msra.mxu0 0
      %766 = vmatprep.mubr.bf16.mxu0 0
      %767 = vmatmul.mubr.bf16.gmra.mrb[0].mxu0 %v701
      %v768 = vpop.f32.mrb[0].mxu0
      %v769 = vadd.f32 %v583, %v768
      %v770 = vpop.f32.mrb[0].mxu0
      %v771 = vpop.f32.mrb[0].mxu0
      %v772 = vadd.f32 %v586, %v771
      %v773 = vpop.f32.mrb[0].mxu0
      %774 = vmatprep.mubr.bf16.mxu0 0
      %775 = vmatmul.mubr.bf16.gmra.mrb[0].mxu0 %v703
      %v776 = vpop.f32.mrb[0].mxu0
      %v777 = vadd.f32 %v591, %v776
      %v778 = vpop.f32.mrb[0].mxu0
      %v779 = vpop.f32.mrb[0].mxu0
      %v780 = vadd.f32 %v594, %v779
      %v781 = vpop.f32.mrb[0].mxu0
      %782 = vmatprep.mubr.bf16.mxu0 0
      %783 = vmatmul.mubr.bf16.gmra.mrb[0].mxu0 %v705
      %v784 = vpop.f32.mrb[0].mxu0
      %v785 = vadd.f32 %v599, %v784
      %v786 = vpop.f32.mrb[0].mxu0
      %v787 = vpop.f32.mrb[0].mxu0
      %v788 = vadd.f32 %v602, %v787
      %v789 = vpop.f32.mrb[0].mxu0
      %790 = vmatprep.mubr.bf16.mxu0 0
      %791 = vmatmul.mubr.bf16.gmra.mrb[0].mxu0 %v707
      %v792 = vpop.f32.mrb[0].mxu0
      %v793 = vadd.f32 %v607, %v792
      %v794 = vpop.f32.mrb[0].mxu0
      %v795 = vpop.f32.mrb[0].mxu0
      %v796 = vadd.f32 %v610, %v795
      %v797 = vpop.f32.mrb[0].mxu0
      %798 = vmatprep.mubr.bf16.mxu0 0
      %799 = vmatmul.mubr.bf16.gmra.mrb[0].mxu0 %v709
      %v800 = vpop.f32.mrb[0].mxu0
      %v801 = vadd.f32 %v615, %v800
      %v802 = vpop.f32.mrb[0].mxu0
      %v803 = vpop.f32.mrb[0].mxu0
      %v804 = vadd.f32 %v618, %v803
      %v805 = vpop.f32.mrb[0].mxu0
      %806 = vmatprep.mubr.bf16.mxu0 0
      %807 = vmatmul.mubr.bf16.gmra.mrb[0].mxu0 %v711
      %v808 = vpop.f32.mrb[0].mxu0
      %v809 = vadd.f32 %v623, %v808
      %v810 = vpop.f32.mrb[0].mxu0
      %v811 = vpop.f32.mrb[0].mxu0
      %v812 = vadd.f32 %v626, %v811
      %v813 = vpop.f32.mrb[0].mxu0
      %814 = vmatprep.mubr.bf16.mxu0 0
      %815 = vmatmul.mubr.bf16.gmra.mrb[0].mxu0 %v713
      %v816 = vpop.f32.mrb[0].mxu0
      %v817 = vadd.f32 %v631, %v816
      %v818 = vpop.f32.mrb[0].mxu0
      %v819 = vpop.f32.mrb[0].mxu0
      %v820 = vadd.f32 %v634, %v819
      %v821 = vpop.f32.mrb[0].mxu0
      %822 = vmatprep.mubr.bf16.mxu0 0
      %823 = vmatmul.mubr.bf16.gmra.mrb[0].mxu0 %v715
      %v824 = vpop.f32.mrb[0].mxu0
      %v825 = vadd.f32 %v639, %v824
      %v826 = vpop.f32.mrb[0].mxu0
      %v827 = vpop.f32.mrb[0].mxu0
      %v828 = vadd.f32 %v642, %v827
      %v829 = vpop.f32.mrb[0].mxu0
      %830 = vmatprep.mubr.bf16.mxu0 0
      %831 = vmatmul.mubr.bf16.gmra.mrb[0].mxu0 %v717
      %v832 = vpop.f32.mrb[0].mxu0
      %v833 = vadd.f32 %v647, %v832
      %v834 = vpop.f32.mrb[0].mxu0
      %v835 = vpop.f32.mrb[0].mxu0
      %v836 = vadd.f32 %v650, %v835
      %v837 = vpop.f32.mrb[0].mxu0
      %838 = vmatprep.mubr.bf16.mxu0 0
      %839 = vmatmul.mubr.bf16.gmra.mrb[0].mxu0 %v719
      %v840 = vpop.f32.mrb[0].mxu0
      %v841 = vadd.f32 %v655, %v840
      %v842 = vpop.f32.mrb[0].mxu0
      %v843 = vpop.f32.mrb[0].mxu0
      %v844 = vadd.f32 %v658, %v843
      %v845 = vpop.f32.mrb[0].mxu0
      %846 = vmatprep.mubr.bf16.mxu0 0
      %847 = vmatmul.mubr.bf16.gmra.mrb[0].mxu0 %v721
      %v848 = vpop.f32.mrb[0].mxu0
      %v849 = vadd.f32 %v663, %v848
      %v850 = vpop.f32.mrb[0].mxu0
      %v851 = vpop.f32.mrb[0].mxu0
      %v852 = vadd.f32 %v666, %v851
      %v853 = vpop.f32.mrb[0].mxu0
      %854 = vmatprep.mubr.bf16.mxu0 0
      %855 = vmatmul.mubr.bf16.gmra.mrb[0].mxu0 %v723
      %v856 = vpop.f32.mrb[0].mxu0
      %v857 = vadd.f32 %v671, %v856
      %v858 = vpop.f32.mrb[0].mxu0
      %v859 = vpop.f32.mrb[0].mxu0
      %v860 = vadd.f32 %v674, %v859
      %v861 = vpop.f32.mrb[0].mxu0
      %862 = vmatprep.mubr.bf16.mxu0 0
      %863 = vmatmul.mubr.bf16.gmra.mrb[0].mxu0 %v725
      %v864 = vpop.f32.mrb[0].mxu0
      %v865 = vadd.f32 %v679, %v864
      %v866 = vpop.f32.mrb[0].mxu0
      %v867 = vpop.f32.mrb[0].mxu0
      %v868 = vadd.f32 %v682, %v867
      %v869 = vpop.f32.mrb[0].mxu0
      %870 = vmatprep.mubr.bf16.mxu0 0
      %871 = vmatmul.mubr.bf16.gmra.mrb[0].mxu0 %v727
      %v872 = vpop.f32.mrb[0].mxu0
      %v873 = vadd.f32 %v687, %v872
      %v874 = vpop.f32.mrb[0].mxu0
      %v875 = vpop.f32.mrb[0].mxu0
      %v876 = vadd.f32 %v690, %v875
      %v877 = vpop.f32.mrb[0].mxu0
      %878 = vmatprep.mubr.bf16.mxu0 0
      %879 = vmatmul.mubr.bf16.gmra.mrb[0].mxu0 %v729
      %v880 = vpop.f32.mrb[0].mxu0
      %v881 = vadd.f32 %v695, %v880
      %v882 = vpop.f32.mrb[0].mxu0
      %v883 = vpop.f32.mrb[0].mxu0
      %v884 = vadd.f32 %v698, %v883
      %v885 = vpop.f32.mrb[0].mxu0
      %886 = vdwg.mxu0
      %s887 = scalar_lea.vmem %s2, 4
      %v888 = vld [vmem:[%s887] sm:$0x3]
      %v889 = vsel %vm498, %v369, 0
      %v892 = vsel %vm544, %v888, 0
      %894 = vmatprep.subr.bf16.mxu0 0
      %895 = vmatpush1.bf16.msra.mxu0 %v892
      %896 = vmatprep.subr.bf16.mxu0 0
      %897 = vmatpush1.bf16.msra.mxu0 0
      %898 = vmatprep.subr.bf16.mxu0 0
      %899 = vmatpush1.bf16.msra.mxu0 0
      %900 = vmatprep.subr.bf16.mxu0 0
      %901 = vmatpush1.bf16.msra.mxu0 0
      %902 = vmatprep.subr.bf16.mxu0 0
      %903 = vmatpush1.bf16.msra.mxu0 0
      %904 = vmatprep.subr.bf16.mxu0 0
      %905 = vmatpush1.bf16.msra.mxu0 0
      %906 = vmatprep.subr.bf16.mxu0 0
      %907 = vmatpush1.bf16.msra.mxu0 0
      %908 = vmatprep.subr.bf16.mxu0 0
      %909 = vmatpush1.bf16.msra.mxu0 0
      %910 = vmatprep.subr.bf16.mxu0 0
      %911 = vmatpush1.bf16.msra.mxu0 0
      %912 = vmatprep.subr.bf16.mxu0 0
      %913 = vmatpush1.bf16.msra.mxu0 0
      %914 = vmatprep.subr.bf16.mxu0 0
      %915 = vmatpush1.bf16.msra.mxu0 0
      %916 = vmatprep.subr.bf16.mxu0 0
      %917 = vmatpush1.bf16.msra.mxu0 0
      %918 = vmatprep.subr.bf16.mxu0 0
      %919 = vmatpush1.bf16.msra.mxu0 0
      %920 = vmatprep.subr.bf16.mxu0 0
      %921 = vmatpush1.bf16.msra.mxu0 0
      %922 = vmatprep.subr.bf16.mxu0 0
      %923 = vmatpush1.bf16.msra.mxu0 0
      %924 = vmatprep.subr.bf16.mxu0 0
      %925 = vmatpush1.bf16.msra.mxu0 0
      %926 = vmatprep.mubr.bf16.mxu0 0
      %927 = vmatmul.mubr.bf16.gmra.mrb[0].mxu0 %v703
      %v928 = vpop.f32.mrb[0].mxu0
      %v929 = vadd.f32 0.0, %v928
      %v930 = vpop.f32.mrb[0].mxu0
      %v931 = vpop.f32.mrb[0].mxu0
      %v932 = vadd.f32 0.0, %v931
      %v933 = vpop.f32.mrb[0].mxu0
      %934 = vmatprep.mubr.bf16.mxu0 0
      %935 = vmatmul.mubr.bf16.gmra.mrb[0].mxu0 %v705
      %v936 = vpop.f32.mrb[0].mxu0
      %v937 = vadd.f32 0.0, %v936
      %v938 = vpop.f32.mrb[0].mxu0
      %v939 = vpop.f32.mrb[0].mxu0
      %v940 = vadd.f32 0.0, %v939
      %v941 = vpop.f32.mrb[0].mxu0
      %942 = vmatprep.mubr.bf16.mxu0 0
      %943 = vmatmul.mubr.bf16.gmra.mrb[0].mxu0 %v707
      %v944 = vpop.f32.mrb[0].mxu0
      %v945 = vadd.f32 0.0, %v944
      %v946 = vpop.f32.mrb[0].mxu0
      %v947 = vpop.f32.mrb[0].mxu0
      %v948 = vadd.f32 0.0, %v947
      %v949 = vpop.f32.mrb[0].mxu0
      %950 = vmatprep.mubr.bf16.mxu0 0
      %951 = vmatmul.mubr.bf16.gmra.mrb[0].mxu0 %v709
      %v952 = vpop.f32.mrb[0].mxu0
      %v953 = vadd.f32 0.0, %v952
      %v954 = vpop.f32.mrb[0].mxu0
      %v955 = vpop.f32.mrb[0].mxu0
      %v956 = vadd.f32 0.0, %v955
      %v957 = vpop.f32.mrb[0].mxu0
      %958 = vmatprep.mubr.bf16.mxu0 0
      %959 = vmatmul.mubr.bf16.gmra.mrb[0].mxu0 %v711
      %v960 = vpop.f32.mrb[0].mxu0
      %v961 = vadd.f32 0.0, %v960
      %v962 = vpop.f32.mrb[0].mxu0
      %v963 = vpop.f32.mrb[0].mxu0
      %v964 = vadd.f32 0.0, %v963
      %v965 = vpop.f32.mrb[0].mxu0
      %966 = vmatprep.mubr.bf16.mxu0 0
      %967 = vmatmul.mubr.bf16.gmra.mrb[0].mxu0 %v713
      %v968 = vpop.f32.mrb[0].mxu0
      %v969 = vadd.f32 0.0, %v968
      %v970 = vpop.f32.mrb[0].mxu0
      %v971 = vpop.f32.mrb[0].mxu0
      %v972 = vadd.f32 0.0, %v971
      %v973 = vpop.f32.mrb[0].mxu0
      %974 = vmatprep.mubr.bf16.mxu0 0
      %975 = vmatmul.mubr.bf16.gmra.mrb[0].mxu0 %v715
      %v976 = vpop.f32.mrb[0].mxu0
      %v977 = vadd.f32 0.0, %v976
      %v978 = vpop.f32.mrb[0].mxu0
      %v979 = vpop.f32.mrb[0].mxu0
      %v980 = vadd.f32 0.0, %v979
      %v981 = vpop.f32.mrb[0].mxu0
      %982 = vmatprep.mubr.bf16.mxu0 0
      %983 = vmatmul.mubr.bf16.gmra.mrb[0].mxu0 %v717
      %v984 = vpop.f32.mrb[0].mxu0
      %v985 = vadd.f32 0.0, %v984
      %v986 = vpop.f32.mrb[0].mxu0
      %v987 = vpop.f32.mrb[0].mxu0
      %v988 = vadd.f32 0.0, %v987
      %v989 = vpop.f32.mrb[0].mxu0
      %990 = vmatprep.mubr.bf16.mxu0 0
      %991 = vmatmul.mubr.bf16.gmra.mrb[0].mxu0 %v719
      %v992 = vpop.f32.mrb[0].mxu0
      %v993 = vadd.f32 0.0, %v992
      %v994 = vpop.f32.mrb[0].mxu0
      %v995 = vpop.f32.mrb[0].mxu0
      %v996 = vadd.f32 0.0, %v995
      %v997 = vpop.f32.mrb[0].mxu0
      %998 = vmatprep.mubr.bf16.mxu0 0
      %999 = vmatmul.mubr.bf16.gmra.mrb[0].mxu0 %v721
      %v1000 = vpop.f32.mrb[0].mxu0
      %v1001 = vadd.f32 0.0, %v1000
      %v1002 = vpop.f32.mrb[0].mxu0
      %v1003 = vpop.f32.mrb[0].mxu0
      %v1004 = vadd.f32 0.0, %v1003
      %v1005 = vpop.f32.mrb[0].mxu0
      %1006 = vmatprep.mubr.bf16.mxu0 0
      %1007 = vmatmul.mubr.bf16.gmra.mrb[0].mxu0 %v723
      %v1008 = vpop.f32.mrb[0].mxu0
      %v1009 = vadd.f32 0.0, %v1008
      %v1010 = vpop.f32.mrb[0].mxu0
      %v1011 = vpop.f32.mrb[0].mxu0
      %v1012 = vadd.f32 0.0, %v1011
      %v1013 = vpop.f32.mrb[0].mxu0
      %1014 = vmatprep.mubr.bf16.mxu0 0
      %1015 = vmatmul.mubr.bf16.gmra.mrb[0].mxu0 %v725
      %v1016 = vpop.f32.mrb[0].mxu0
      %v1017 = vadd.f32 0.0, %v1016
      %v1018 = vpop.f32.mrb[0].mxu0
      %v1019 = vpop.f32.mrb[0].mxu0
      %v1020 = vadd.f32 0.0, %v1019
      %v1021 = vpop.f32.mrb[0].mxu0
      %1022 = vmatprep.mubr.bf16.mxu0 0
      %1023 = vmatmul.mubr.bf16.gmra.mrb[0].mxu0 %v727
      %v1024 = vpop.f32.mrb[0].mxu0
      %v1025 = vadd.f32 0.0, %v1024
      %v1026 = vpop.f32.mrb[0].mxu0
      %v1027 = vpop.f32.mrb[0].mxu0
      %v1028 = vadd.f32 0.0, %v1027
      %v1029 = vpop.f32.mrb[0].mxu0
      %1030 = vmatprep.mubr.bf16.mxu0 0
      %1031 = vmatmul.mubr.bf16.gmra.mrb[0].mxu0 %v729
      %v1032 = vpop.f32.mrb[0].mxu0
      %v1033 = vadd.f32 0.0, %v1032
      %v1034 = vpop.f32.mrb[0].mxu0
      %v1035 = vpop.f32.mrb[0].mxu0
      %v1036 = vadd.f32 0.0, %v1035
      %v1037 = vpop.f32.mrb[0].mxu0
      %1038 = vmatprep.mubr.bf16.mxu0 0
      %1039 = vmatmul.mubr.bf16.gmra.mrb[0].mxu0 %v889
      %v1040 = vpop.f32.mrb[0].mxu0
      %v1041 = vadd.f32 0.0, %v1040
      %v1042 = vpop.f32.mrb[0].mxu0
      %v1043 = vpop.f32.mrb[0].mxu0
      %v1044 = vadd.f32 0.0, %v1043
      %v1045 = vpop.f32.mrb[0].mxu0
      %1046 = vdwg.mxu0
      %v1047 = vadd.f32 %v769, %v929
      %v1048 = vadd.f32 %v772, %v932
      %v1049 = vadd.f32 %v777, %v937
      %v1050 = vadd.f32 %v780, %v940
      %v1051 = vadd.f32 %v785, %v945
      %v1052 = vadd.f32 %v788, %v948
      %v1053 = vadd.f32 %v793, %v953
      %v1054 = vadd.f32 %v796, %v956
      %v1055 = vadd.f32 %v801, %v961
      %v1056 = vadd.f32 %v804, %v964
      %v1057 = vadd.f32 %v809, %v969
      %v1058 = vadd.f32 %v812, %v972
      %v1059 = vadd.f32 %v817, %v977
      %v1060 = vadd.f32 %v820, %v980
      %v1061 = vadd.f32 %v825, %v985
      %v1062 = vadd.f32 %v828, %v988
      %v1063 = vadd.f32 %v833, %v993
      %v1064 = vadd.f32 %v836, %v996
      %v1065 = vadd.f32 %v841, %v1001
      %v1066 = vadd.f32 %v844, %v1004
      %v1067 = vadd.f32 %v849, %v1009
      %v1068 = vadd.f32 %v852, %v1012
      %v1069 = vadd.f32 %v857, %v1017
      %v1070 = vadd.f32 %v860, %v1020
      %v1071 = vadd.f32 %v865, %v1025
      %v1072 = vadd.f32 %v868, %v1028
      %v1073 = vadd.f32 %v873, %v1033
      %v1074 = vadd.f32 %v876, %v1036
      %v1075 = vadd.f32 %v881, %v1041
      %v1076 = vadd.f32 %v884, %v1044
      %s1077 = scalar_lea.vmem %s2, 6
      %v1078 = vld [vmem:[%s1077] sm:$0x3]
      %v1079 = vshrl.u32 %v369, 16
      %v1081 = vor.u32 %v1079, %v496
      %v1082 = vsel %vm373, %v1081, %v496
      %v1084 = vsel %vm498, %v1082, 0
      %v1087 = vsel %vm544, %v1078, 0
      %1089 = vmatprep.subr.bf16.mxu0 0
      %1090 = vmatpush1.bf16.msra.mxu0 %v1087
      %1091 = vmatprep.subr.bf16.mxu0 0
      %1092 = vmatpush1.bf16.msra.mxu0 0
      %1093 = vmatprep.subr.bf16.mxu0 0
      %1094 = vmatpush1.bf16.msra.mxu0 0
      %1095 = vmatprep.subr.bf16.mxu0 0
      %1096 = vmatpush1.bf16.msra.mxu0 0
      %1097 = vmatprep.subr.bf16.mxu0 0
      %1098 = vmatpush1.bf16.msra.mxu0 0
      %1099 = vmatprep.subr.bf16.mxu0 0
      %1100 = vmatpush1.bf16.msra.mxu0 0
      %1101 = vmatprep.subr.bf16.mxu0 0
      %1102 = vmatpush1.bf16.msra.mxu0 0
      %1103 = vmatprep.subr.bf16.mxu0 0
      %1104 = vmatpush1.bf16.msra.mxu0 0
      %1105 = vmatprep.subr.bf16.mxu0 0
      %1106 = vmatpush1.bf16.msra.mxu0 0
      %1107 = vmatprep.subr.bf16.mxu0 0
      %1108 = vmatpush1.bf16.msra.mxu0 0
      %1109 = vmatprep.subr.bf16.mxu0 0
      %1110 = vmatpush1.bf16.msra.mxu0 0
      %1111 = vmatprep.subr.bf16.mxu0 0
      %1112 = vmatpush1.bf16.msra.mxu0 0
      %1113 = vmatprep.subr.bf16.mxu0 0
      %1114 = vmatpush1.bf16.msra.mxu0 0
      %1115 = vmatprep.subr.bf16.mxu0 0
      %1116 = vmatpush1.bf16.msra.mxu0 0
      %1117 = vmatprep.subr.bf16.mxu0 0
      %1118 = vmatpush1.bf16.msra.mxu0 0
      %1119 = vmatprep.subr.bf16.mxu0 0
      %1120 = vmatpush1.bf16.msra.mxu0 0
      %1121 = vmatprep.mubr.bf16.mxu0 0
      %1122 = vmatmul.mubr.bf16.gmra.mrb[0].mxu0 %v503
      %v1123 = vpop.f32.mrb[0].mxu0
      %v1124 = vadd.f32 0.0, %v1123
      %v1125 = vpop.f32.mrb[0].mxu0
      %v1126 = vpop.f32.mrb[0].mxu0
      %v1127 = vadd.f32 0.0, %v1126
      %v1128 = vpop.f32.mrb[0].mxu0
      %1129 = vmatprep.mubr.bf16.mxu0 0
      %1130 = vmatmul.mubr.bf16.gmra.mrb[0].mxu0 %v506
      %v1131 = vpop.f32.mrb[0].mxu0
      %v1132 = vadd.f32 0.0, %v1131
      %v1133 = vpop.f32.mrb[0].mxu0
      %v1134 = vpop.f32.mrb[0].mxu0
      %v1135 = vadd.f32 0.0, %v1134
      %v1136 = vpop.f32.mrb[0].mxu0
      %1137 = vmatprep.mubr.bf16.mxu0 0
      %1138 = vmatmul.mubr.bf16.gmra.mrb[0].mxu0 %v509
      %v1139 = vpop.f32.mrb[0].mxu0
      %v1140 = vadd.f32 0.0, %v1139
      %v1141 = vpop.f32.mrb[0].mxu0
      %v1142 = vpop.f32.mrb[0].mxu0
      %v1143 = vadd.f32 0.0, %v1142
      %v1144 = vpop.f32.mrb[0].mxu0
      %1145 = vmatprep.mubr.bf16.mxu0 0
      %1146 = vmatmul.mubr.bf16.gmra.mrb[0].mxu0 %v512
      %v1147 = vpop.f32.mrb[0].mxu0
      %v1148 = vadd.f32 0.0, %v1147
      %v1149 = vpop.f32.mrb[0].mxu0
      %v1150 = vpop.f32.mrb[0].mxu0
      %v1151 = vadd.f32 0.0, %v1150
      %v1152 = vpop.f32.mrb[0].mxu0
      %1153 = vmatprep.mubr.bf16.mxu0 0
      %1154 = vmatmul.mubr.bf16.gmra.mrb[0].mxu0 %v515
      %v1155 = vpop.f32.mrb[0].mxu0
      %v1156 = vadd.f32 0.0, %v1155
      %v1157 = vpop.f32.mrb[0].mxu0
      %v1158 = vpop.f32.mrb[0].mxu0
      %v1159 = vadd.f32 0.0, %v1158
      %v1160 = vpop.f32.mrb[0].mxu0
      %1161 = vmatprep.mubr.bf16.mxu0 0
      %1162 = vmatmul.mubr.bf16.gmra.mrb[0].mxu0 %v518
      %v1163 = vpop.f32.mrb[0].mxu0
      %v1164 = vadd.f32 0.0, %v1163
      %v1165 = vpop.f32.mrb[0].mxu0
      %v1166 = vpop.f32.mrb[0].mxu0
      %v1167 = vadd.f32 0.0, %v1166
      %v1168 = vpop.f32.mrb[0].mxu0
      %1169 = vmatprep.mubr.bf16.mxu0 0
      %1170 = vmatmul.mubr.bf16.gmra.mrb[0].mxu0 %v521
      %v1171 = vpop.f32.mrb[0].mxu0
      %v1172 = vadd.f32 0.0, %v1171
      %v1173 = vpop.f32.mrb[0].mxu0
      %v1174 = vpop.f32.mrb[0].mxu0
      %v1175 = vadd.f32 0.0, %v1174
      %v1176 = vpop.f32.mrb[0].mxu0
      %1177 = vmatprep.mubr.bf16.mxu0 0
      %1178 = vmatmul.mubr.bf16.gmra.mrb[0].mxu0 %v524
      %v1179 = vpop.f32.mrb[0].mxu0
      %v1180 = vadd.f32 0.0, %v1179
      %v1181 = vpop.f32.mrb[0].mxu0
      %v1182 = vpop.f32.mrb[0].mxu0
      %v1183 = vadd.f32 0.0, %v1182
      %v1184 = vpop.f32.mrb[0].mxu0
      %1185 = vmatprep.mubr.bf16.mxu0 0
      %1186 = vmatmul.mubr.bf16.gmra.mrb[0].mxu0 %v527
      %v1187 = vpop.f32.mrb[0].mxu0
      %v1188 = vadd.f32 0.0, %v1187
      %v1189 = vpop.f32.mrb[0].mxu0
      %v1190 = vpop.f32.mrb[0].mxu0
      %v1191 = vadd.f32 0.0, %v1190
      %v1192 = vpop.f32.mrb[0].mxu0
      %1193 = vmatprep.mubr.bf16.mxu0 0
      %1194 = vmatmul.mubr.bf16.gmra.mrb[0].mxu0 %v530
      %v1195 = vpop.f32.mrb[0].mxu0
      %v1196 = vadd.f32 0.0, %v1195
      %v1197 = vpop.f32.mrb[0].mxu0
      %v1198 = vpop.f32.mrb[0].mxu0
      %v1199 = vadd.f32 0.0, %v1198
      %v1200 = vpop.f32.mrb[0].mxu0
      %1201 = vmatprep.mubr.bf16.mxu0 0
      %1202 = vmatmul.mubr.bf16.gmra.mrb[0].mxu0 %v533
      %v1203 = vpop.f32.mrb[0].mxu0
      %v1204 = vadd.f32 0.0, %v1203
      %v1205 = vpop.f32.mrb[0].mxu0
      %v1206 = vpop.f32.mrb[0].mxu0
      %v1207 = vadd.f32 0.0, %v1206
      %v1208 = vpop.f32.mrb[0].mxu0
      %1209 = vmatprep.mubr.bf16.mxu0 0
      %1210 = vmatmul.mubr.bf16.gmra.mrb[0].mxu0 %v536
      %v1211 = vpop.f32.mrb[0].mxu0
      %v1212 = vadd.f32 0.0, %v1211
      %v1213 = vpop.f32.mrb[0].mxu0
      %v1214 = vpop.f32.mrb[0].mxu0
      %v1215 = vadd.f32 0.0, %v1214
      %v1216 = vpop.f32.mrb[0].mxu0
      %1217 = vmatprep.mubr.bf16.mxu0 0
      %1218 = vmatmul.mubr.bf16.gmra.mrb[0].mxu0 %v539
      %v1219 = vpop.f32.mrb[0].mxu0
      %v1220 = vadd.f32 0.0, %v1219
      %v1221 = vpop.f32.mrb[0].mxu0
      %v1222 = vpop.f32.mrb[0].mxu0
      %v1223 = vadd.f32 0.0, %v1222
      %v1224 = vpop.f32.mrb[0].mxu0
      %1225 = vmatprep.mubr.bf16.mxu0 0
      %1226 = vmatmul.mubr.bf16.gmra.mrb[0].mxu0 %v542
      %v1227 = vpop.f32.mrb[0].mxu0
      %v1228 = vadd.f32 0.0, %v1227
      %v1229 = vpop.f32.mrb[0].mxu0
      %v1230 = vpop.f32.mrb[0].mxu0
      %v1231 = vadd.f32 0.0, %v1230
      %v1232 = vpop.f32.mrb[0].mxu0
      %1233 = vmatprep.mubr.bf16.mxu0 0
      %1234 = vmatmul.mubr.bf16.gmra.mrb[0].mxu0 %v1084
      %v1235 = vpop.f32.mrb[0].mxu0
      %v1236 = vadd.f32 0.0, %v1235
      %v1237 = vpop.f32.mrb[0].mxu0
      %v1238 = vpop.f32.mrb[0].mxu0
      %v1239 = vadd.f32 0.0, %v1238
      %v1240 = vpop.f32.mrb[0].mxu0
      %1241 = vdwg.mxu0
      %v1242 = vadd.f32 %v1047, %v1124
      %v1243 = vadd.f32 %v1048, %v1127
      %v1244 = vadd.f32 %v1049, %v1132
      %v1245 = vadd.f32 %v1050, %v1135
      %v1246 = vadd.f32 %v1051, %v1140
      %v1247 = vadd.f32 %v1052, %v1143
      %v1248 = vadd.f32 %v1053, %v1148
      %v1249 = vadd.f32 %v1054, %v1151
      %v1250 = vadd.f32 %v1055, %v1156
      %v1251 = vadd.f32 %v1056, %v1159
      %v1252 = vadd.f32 %v1057, %v1164
      %v1253 = vadd.f32 %v1058, %v1167
      %v1254 = vadd.f32 %v1059, %v1172
      %v1255 = vadd.f32 %v1060, %v1175
      %v1256 = vadd.f32 %v1061, %v1180
      %v1257 = vadd.f32 %v1062, %v1183
      %v1258 = vadd.f32 %v1063, %v1188
      %v1259 = vadd.f32 %v1064, %v1191
      %v1260 = vadd.f32 %v1065, %v1196
      %v1261 = vadd.f32 %v1066, %v1199
      %v1262 = vadd.f32 %v1067, %v1204
      %v1263 = vadd.f32 %v1068, %v1207
      %v1264 = vadd.f32 %v1069, %v1212
      %v1265 = vadd.f32 %v1070, %v1215
      %v1266 = vadd.f32 %v1071, %v1220
      %v1267 = vadd.f32 %v1072, %v1223
      %v1268 = vadd.f32 %v1073, %v1228
      %v1269 = vadd.f32 %v1074, %v1231
      %v1270 = vadd.f32 %v1075, %v1236
      %v1271 = vadd.f32 %v1076, %v1239
      %v1272 = vld [vmem:[%s3] sm:$0x1]
      %v1274 = vlaneseq
      %v1275 = vshrl.u32 %v1274, 7
      %v1276 = vsub.s32 0, %v1275
      %v1277 = vrot.slane %v1272, %v1276
      %v1279 = vadd.f32 %v1242, %v1277
      %v1280 = vadd.f32 %v1243, %v1277
      %v1281 = vadd.f32 %v1244, %v1277
      %v1282 = vadd.f32 %v1245, %v1277
      %v1283 = vadd.f32 %v1246, %v1277
      %v1284 = vadd.f32 %v1247, %v1277
      %v1285 = vadd.f32 %v1248, %v1277
      %v1286 = vadd.f32 %v1249, %v1277
      %v1287 = vadd.f32 %v1250, %v1277
      %v1288 = vadd.f32 %v1251, %v1277
      %v1289 = vadd.f32 %v1252, %v1277
      %v1290 = vadd.f32 %v1253, %v1277
      %v1291 = vadd.f32 %v1254, %v1277
      %v1292 = vadd.f32 %v1255, %v1277
      %v1293 = vadd.f32 %v1256, %v1277
      %v1294 = vadd.f32 %v1257, %v1277
      %v1295 = vadd.f32 %v1258, %v1277
      %v1296 = vadd.f32 %v1259, %v1277
      %v1297 = vadd.f32 %v1260, %v1277
      %v1298 = vadd.f32 %v1261, %v1277
      %v1299 = vadd.f32 %v1262, %v1277
      %v1300 = vadd.f32 %v1263, %v1277
      %v1301 = vadd.f32 %v1264, %v1277
      %v1302 = vadd.f32 %v1265, %v1277
      %v1303 = vadd.f32 %v1266, %v1277
      %v1304 = vadd.f32 %v1267, %v1277
      %v1305 = vadd.f32 %v1268, %v1277
      %v1306 = vadd.f32 %v1269, %v1277
      %v1307 = vadd.f32 %v1270, %v1277
      %v1308 = vadd.f32 %v1271, %v1277
      %vm1309 = vcmp.ge.f32.partialorder %v1279, 0.0
      %vm1310 = vcmp.ge.f32.partialorder %v1280, 0.0
      %vm1311 = vcmp.ge.f32.partialorder %v1281, 0.0
      %vm1312 = vcmp.ge.f32.partialorder %v1282, 0.0
      %vm1313 = vcmp.ge.f32.partialorder %v1283, 0.0
      %vm1314 = vcmp.ge.f32.partialorder %v1284, 0.0
      %vm1315 = vcmp.ge.f32.partialorder %v1285, 0.0
      %vm1316 = vcmp.ge.f32.partialorder %v1286, 0.0
      %vm1317 = vcmp.ge.f32.partialorder %v1287, 0.0
      %vm1318 = vcmp.ge.f32.partialorder %v1288, 0.0
      %vm1319 = vcmp.ge.f32.partialorder %v1289, 0.0
      %vm1320 = vcmp.ge.f32.partialorder %v1290, 0.0
      %vm1321 = vcmp.ge.f32.partialorder %v1291, 0.0
      %vm1322 = vcmp.ge.f32.partialorder %v1292, 0.0
      %vm1323 = vcmp.ge.f32.partialorder %v1293, 0.0
      %vm1324 = vcmp.ge.f32.partialorder %v1294, 0.0
      %vm1325 = vcmp.ge.f32.partialorder %v1295, 0.0
      %vm1326 = vcmp.ge.f32.partialorder %v1296, 0.0
      %vm1327 = vcmp.ge.f32.partialorder %v1297, 0.0
      %vm1328 = vcmp.ge.f32.partialorder %v1298, 0.0
      %vm1329 = vcmp.ge.f32.partialorder %v1299, 0.0
      %vm1330 = vcmp.ge.f32.partialorder %v1300, 0.0
      %vm1331 = vcmp.ge.f32.partialorder %v1301, 0.0
      %vm1332 = vcmp.ge.f32.partialorder %v1302, 0.0
      %vm1333 = vcmp.ge.f32.partialorder %v1303, 0.0
      %vm1334 = vcmp.ge.f32.partialorder %v1304, 0.0
      %vm1335 = vcmp.ge.f32.partialorder %v1305, 0.0
      %vm1336 = vcmp.ge.f32.partialorder %v1306, 0.0
      %vm1337 = vcmp.ge.f32.partialorder %v1307, 0.0
      %vm1338 = vcmp.ge.f32.partialorder %v1308, 0.0
      %v1339 = vmul.f32 %v1279, 0.01
      %v1340 = vmul.f32 %v1280, 0.01
      %v1341 = vmul.f32 %v1281, 0.01
      %v1342 = vmul.f32 %v1282, 0.01
      %v1343 = vmul.f32 %v1283, 0.01
      %v1344 = vmul.f32 %v1284, 0.01
      %v1345 = vmul.f32 %v1285, 0.01
      %v1346 = vmul.f32 %v1286, 0.01
      %v1347 = vmul.f32 %v1287, 0.01
      %v1348 = vmul.f32 %v1288, 0.01
      %v1349 = vmul.f32 %v1289, 0.01
      %v1350 = vmul.f32 %v1290, 0.01
      %v1351 = vmul.f32 %v1291, 0.01
      %v1352 = vmul.f32 %v1292, 0.01
      %v1353 = vmul.f32 %v1293, 0.01
      %v1354 = vmul.f32 %v1294, 0.01
      %v1355 = vmul.f32 %v1295, 0.01
      %v1356 = vmul.f32 %v1296, 0.01
      %v1357 = vmul.f32 %v1297, 0.01
      %v1358 = vmul.f32 %v1298, 0.01
      %v1359 = vmul.f32 %v1299, 0.01
      %v1360 = vmul.f32 %v1300, 0.01
      %v1361 = vmul.f32 %v1301, 0.01
      %v1362 = vmul.f32 %v1302, 0.01
      %v1363 = vmul.f32 %v1303, 0.01
      %v1364 = vmul.f32 %v1304, 0.01
      %v1365 = vmul.f32 %v1305, 0.01
      %v1366 = vmul.f32 %v1306, 0.01
      %v1367 = vmul.f32 %v1307, 0.01
      %v1368 = vmul.f32 %v1308, 0.01
      %v1369 = vsel %vm1309, %v1279, %v1339
      %v1370 = vsel %vm1310, %v1280, %v1340
      %v1371 = vsel %vm1311, %v1281, %v1341
      %v1372 = vsel %vm1312, %v1282, %v1342
      %v1373 = vsel %vm1313, %v1283, %v1343
      %v1374 = vsel %vm1314, %v1284, %v1344
      %v1375 = vsel %vm1315, %v1285, %v1345
      %v1376 = vsel %vm1316, %v1286, %v1346
      %v1377 = vsel %vm1317, %v1287, %v1347
      %v1378 = vsel %vm1318, %v1288, %v1348
      %v1379 = vsel %vm1319, %v1289, %v1349
      %v1380 = vsel %vm1320, %v1290, %v1350
      %v1381 = vsel %vm1321, %v1291, %v1351
      %v1382 = vsel %vm1322, %v1292, %v1352
      %v1383 = vsel %vm1323, %v1293, %v1353
      %v1384 = vsel %vm1324, %v1294, %v1354
      %v1385 = vsel %vm1325, %v1295, %v1355
      %v1386 = vsel %vm1326, %v1296, %v1356
      %v1387 = vsel %vm1327, %v1297, %v1357
      %v1388 = vsel %vm1328, %v1298, %v1358
      %v1389 = vsel %vm1329, %v1299, %v1359
      %v1390 = vsel %vm1330, %v1300, %v1360
      %v1391 = vsel %vm1331, %v1301, %v1361
      %v1392 = vsel %vm1332, %v1302, %v1362
      %v1393 = vsel %vm1333, %v1303, %v1363
      %v1394 = vsel %vm1334, %v1304, %v1364
      %v1395 = vsel %vm1335, %v1305, %v1365
      %v1396 = vsel %vm1336, %v1306, %v1366
      %v1397 = vsel %vm1337, %v1307, %v1367
      %v1398 = vsel %vm1338, %v1308, %v1368
      %v1399 = vpack.c.bf16 %v1370, %v1369
      %v1400 = vpack.c.bf16 %v1372, %v1371
      %v1401 = vpack.c.bf16 %v1374, %v1373
      %v1402 = vpack.c.bf16 %v1376, %v1375
      %v1403 = vpack.c.bf16 %v1378, %v1377
      %v1404 = vpack.c.bf16 %v1380, %v1379
      %v1405 = vpack.c.bf16 %v1382, %v1381
      %v1406 = vpack.c.bf16 %v1384, %v1383
      %v1407 = vpack.c.bf16 %v1386, %v1385
      %v1408 = vpack.c.bf16 %v1388, %v1387
      %v1409 = vpack.c.bf16 %v1390, %v1389
      %v1410 = vpack.c.bf16 %v1392, %v1391
      %v1411 = vpack.c.bf16 %v1394, %v1393
      %v1412 = vpack.c.bf16 %v1396, %v1395
      %v1413 = vpack.c.bf16 %v1398, %v1397
      %v1429 = vunpack.c.l.b16 %v1399
      %v1430 = vunpack.c.h.b16 %v1399
      %v1431 = vunpack.c.l.b16 %v1400
      %v1432 = vunpack.c.h.b16 %v1400
      %v1433 = vunpack.c.l.b16 %v1401
      %v1434 = vunpack.c.h.b16 %v1401
      %v1435 = vunpack.c.l.b16 %v1402
      %v1436 = vunpack.c.h.b16 %v1402
      %v1437 = vunpack.c.l.b16 %v1403
      %v1438 = vunpack.c.h.b16 %v1403
      %v1439 = vunpack.c.l.b16 %v1404
      %v1440 = vunpack.c.h.b16 %v1404
      %v1441 = vunpack.c.l.b16 %v1405
      %v1442 = vunpack.c.h.b16 %v1405
      %v1443 = vunpack.c.l.b16 %v1406
      %v1444 = vunpack.c.h.b16 %v1406
      %v1445 = vunpack.c.l.b16 %v1407
      %v1446 = vunpack.c.h.b16 %v1407
      %v1447 = vunpack.c.l.b16 %v1408
      %v1448 = vunpack.c.h.b16 %v1408
      %v1449 = vunpack.c.l.b16 %v1409
      %v1450 = vunpack.c.h.b16 %v1409
      %v1451 = vunpack.c.l.b16 %v1410
      %v1452 = vunpack.c.h.b16 %v1410
      %v1453 = vunpack.c.l.b16 %v1411
      %v1454 = vunpack.c.h.b16 %v1411
      %v1455 = vunpack.c.l.b16 %v1412
      %v1456 = vunpack.c.h.b16 %v1412
      %v1457 = vunpack.c.l.b16 %v1413
      %v1458 = vunpack.c.h.b16 %v1413
      %v1459 = vpack.c.b16 %v1429, %v1429
      %v1460 = vpack.c.b16 %v1430, %v1430
      %v1461 = vpack.c.b16 %v1431, %v1431
      %v1462 = vpack.c.b16 %v1432, %v1432
      %v1463 = vpack.c.b16 %v1433, %v1433
      %v1464 = vpack.c.b16 %v1434, %v1434
      %v1465 = vpack.c.b16 %v1435, %v1435
      %v1466 = vpack.c.b16 %v1436, %v1436
      %v1467 = vpack.c.b16 %v1437, %v1437
      %v1468 = vpack.c.b16 %v1438, %v1438
      %v1469 = vpack.c.b16 %v1439, %v1439
      %v1470 = vpack.c.b16 %v1440, %v1440
      %v1471 = vpack.c.b16 %v1441, %v1441
      %v1472 = vpack.c.b16 %v1442, %v1442
      %v1473 = vpack.c.b16 %v1443, %v1443
      %v1474 = vpack.c.b16 %v1444, %v1444
      %v1475 = vpack.c.b16 %v1445, %v1445
      %v1476 = vpack.c.b16 %v1446, %v1446
      %v1477 = vpack.c.b16 %v1447, %v1447
      %v1478 = vpack.c.b16 %v1448, %v1448
      %v1479 = vpack.c.b16 %v1449, %v1449
      %v1480 = vpack.c.b16 %v1450, %v1450
      %v1481 = vpack.c.b16 %v1451, %v1451
      %v1482 = vpack.c.b16 %v1452, %v1452
      %v1483 = vpack.c.b16 %v1453, %v1453
      %v1484 = vpack.c.b16 %v1454, %v1454
      %v1485 = vpack.c.b16 %v1455, %v1455
      %v1486 = vpack.c.b16 %v1456, %v1456
      %v1487 = vpack.c.b16 %v1457, %v1457
      %v1488 = vpack.c.b16 %v1458, %v1458
      %vm1519 = vcmask 60416
      %1520 = vst.msk [vmem:[%s319] sm:$0xf] %vm1519, %v1459
      %1521 = vst.msk [vmem:[%s319 + $0x4] sm:$0xf] %vm1519, %v1460
      %1522 = vst.msk [vmem:[%s319 + $0x8] sm:$0xf] %vm1519, %v1461
      %1523 = vst.msk [vmem:[%s319 + $0xc] sm:$0xf] %vm1519, %v1462
      %1524 = vst.msk [vmem:[%s319 + $0x10] sm:$0xf] %vm1519, %v1463
      %1525 = vst.msk [vmem:[%s319 + $0x14] sm:$0xf] %vm1519, %v1464
      %1526 = vst.msk [vmem:[%s319 + $0x18] sm:$0xf] %vm1519, %v1465
      %1527 = vst.msk [vmem:[%s319 + $0x1c] sm:$0xf] %vm1519, %v1466
      %1528 = vst.msk [vmem:[%s319 + $0x20] sm:$0xf] %vm1519, %v1467
      %1529 = vst.msk [vmem:[%s319 + $0x24] sm:$0xf] %vm1519, %v1468
      %1530 = vst.msk [vmem:[%s319 + $0x28] sm:$0xf] %vm1519, %v1469
      %1531 = vst.msk [vmem:[%s319 + $0x2c] sm:$0xf] %vm1519, %v1470
      %1532 = vst.msk [vmem:[%s319 + $0x30] sm:$0xf] %vm1519, %v1471
      %1533 = vst.msk [vmem:[%s319 + $0x34] sm:$0xf] %vm1519, %v1472
      %1534 = vst.msk [vmem:[%s319 + $0x38] sm:$0xf] %vm1519, %v1473
      %1535 = vst.msk [vmem:[%s319 + $0x3c] sm:$0xf] %vm1519, %v1474
      %1536 = vst.msk [vmem:[%s319 + $0x40] sm:$0xf] %vm1519, %v1475
      %1537 = vst.msk [vmem:[%s319 + $0x44] sm:$0xf] %vm1519, %v1476
      %1538 = vst.msk [vmem:[%s319 + $0x48] sm:$0xf] %vm1519, %v1477
      %1539 = vst.msk [vmem:[%s319 + $0x4c] sm:$0xf] %vm1519, %v1478
      %1540 = vst.msk [vmem:[%s319 + $0x50] sm:$0xf] %vm1519, %v1479
      %1541 = vst.msk [vmem:[%s319 + $0x54] sm:$0xf] %vm1519, %v1480
      %1542 = vst.msk [vmem:[%s319 + $0x58] sm:$0xf] %vm1519, %v1481
      %1543 = vst.msk [vmem:[%s319 + $0x5c] sm:$0xf] %vm1519, %v1482
      %1544 = vst.msk [vmem:[%s319 + $0x60] sm:$0xf] %vm1519, %v1483
      %1545 = vst.msk [vmem:[%s319 + $0x64] sm:$0xf] %vm1519, %v1484
      %1546 = vst.msk [vmem:[%s319 + $0x68] sm:$0xf] %vm1519, %v1485
      %1547 = vst.msk [vmem:[%s319 + $0x6c] sm:$0xf] %vm1519, %v1486
      %1548 = vst.msk [vmem:[%s319 + $0x70] sm:$0xf] %vm1519, %v1487
      %1549 = vst.msk [vmem:[%s319 + $0x74] sm:$0xf] %vm1519, %v1488
      %s1550 = smul.u32 30, %s20
      %p1551 = scmp.lt.s32.totalorder %s19, 1
      %s1552 = scalar_select %p1551, %s19, 1
      %p1553 = scmp.lt.s32.totalorder %s1550, 29
      %s1554 = scalar_select %p1553, %s1550, 29
      %s1555 = smul.addr %s1552, 30
      %s1556 = sadd.s32 %s1554, %s1555
      %s1557 = smul.addr %s1556, 4
      %s1558 = scalar_lea.vmem %s4, %s1557
      // Predicated region
      $region37: #{tpu_custom_call.1} parent=35 // pred_check
        %p1559 = pneg %p153
      $region38: #{tpu_custom_call.1} parent=35 // pred_check_branch
        %1561 = sbr.rel (%p1559) target = $region40
      $region39: #{tpu_custom_call.1} parent=35 // pred_region
        %s1562 = smul.u32 30, %s20
      $region40: #{tpu_custom_call.1} parent=35 // pred_fallthru
        _
    $region36: #{tpu_custom_call.1} parent=5 // pred_fallthru
      _
    %p1563 = scmp.le.s32.totalorder 2, %s10
    // Predicated region
    $region41: #{tpu_custom_call.1} parent=5 // pred_check
      %p1564 = pneg %p1563
    $region42: #{tpu_custom_call.1} parent=5 // pred_check_branch
      %1566 = sbr.rel (%p1564) target = $region44
    $region43: #{tpu_custom_call.1} parent=5 // pred_region
      %s1567 = ssub.s32 %s10, 2
      // Predicated region
      $region45: #{tpu_custom_call.1} parent=43 // pred_check
        %p1568 = pneg %p159
      $region46: #{tpu_custom_call.1} parent=43 // pred_check_branch
        %1570 = sbr.rel (%p1568) target = $region48
      $region47: #{tpu_custom_call.1} parent=43 // pred_region
        %s1571 = smul.u32 30, %s22
        %p1572 = scmp.lt.s32.totalorder %s21, 1
        %s1573 = scalar_select %p1572, %s21, 1
        %p1574 = scmp.lt.s32.totalorder %s1571, 29
        %s1575 = scalar_select %p1574, %s1571, 29
        %s1576 = smul.addr %s1573, 30
        %s1577 = sadd.s32 %s1575, %s1576
        %s1578 = smul.addr %s1577, 4
        %s1579 = scalar_lea.vmem %s4, %s1578
      $region48: #{tpu_custom_call.1} parent=43 // pred_fallthru
        _
    $region44: #{tpu_custom_call.1} parent=5 // pred_fallthru
      _
  $region6: #{tpu_custom_call.1} parent=0 // loop_footer
    %s14 = sadd.s32 1, %s10
  $region7: #{tpu_custom_call.1} parent=0 // loop_footer_branch
    %9 = sbr.rel target = $region3
  $region8: #{tpu_custom_call.1} parent=0 // loop_exit
    _

</llo_original>
